<compile_context>
chip_gen: v5e
topology: v5e:2x2
jax: 0.10.0
libtpu: 0.0.40
codegen_flags: <defaults>
</compile_context>

<pallas_src>
import numpy as np

import jax
import jax.numpy as jnp
from jax.experimental import pallas as pl
from jax.experimental.pallas import tpu as pltpu

EMB_DIM = 128          # lane-aligned stand-in for the module's emb_dim=300 (padded to x128)
HID_DIM = 2 * EMB_DIM  # GIN MLP hidden width (256, lane aligned)
NUM_LAYERS = 5         # GNN_node default
BN_EPS = 1e-5
PRED_PAD = 128         # node_pred output 119 padded to 128 lanes (sliced outside the kernel)


def get_atom_feature_dims():
    return [119, 4, 12, 12, 10, 6, 6, 2, 2]


def get_bond_feature_dims():
    return [5, 6, 2]


def _round_up(x, m):
    return (x + m - 1) // m * m


# ---------------------------------------------------------------------------
# Pallas kernel: 5 fused GIN layers + masked-node gather + node_pred linear
# ---------------------------------------------------------------------------
def fused_gnn_kernel(eps1p_ref,                        # SMEM (L,): 1 + eps_l per layer
                     h0_ref,                           # (N, D)      initial node features
                     gat_ref,                          # (E, N)      one-hot of src (gather)
                     scat_ref,                         # (N, E)      one-hot of dst (scatter-add)
                     mask_ref,                         # (M, N)      one-hot of masked nodes
                     eemb_ref,                         # (E, D)      this layer's bond embeddings
                     w1_ref, b1_ref,                   # (D, H) bf16, (1, H) f32  (BN1 folded)
                     w2_ref, b2_ref,                   # (H, D) bf16, (1, D) f32  (BN2 folded)
                     pw_ref, pb_ref,                   # (D, P) bf16, (1, P) f32  node_pred
                     o_ref,                            # (M, P)      masked-node logits
                     h_sc):                            # VMEM (N, D) f32: h resident across layers
    l = pl.program_id(0)
    nl = pl.num_programs(0)

    @pl.when(l == 0)
    def _():
        h_sc[...] = h0_ref[...]

    h = h_sc[...]
    # message: relu(x_src + bond_embedding); x_src via exact one-hot gather matmul (E,N)@(N,D)
    x_src = jnp.dot(gat_ref[...], h, preferred_element_type=jnp.float32)
    msg = jnp.maximum(x_src + eemb_ref[...], 0.0)
    # aggregate: exact scatter-add over destination nodes as (N,E)@(E,D)
    agg = jnp.dot(scat_ref[...], msg, preferred_element_type=jnp.float32)
    # GIN combine
    hc = eps1p_ref[l] * h + agg
    # MLP with eval-mode BatchNorms folded into the linears; bf16 MXU inputs, f32 accumulate
    z = jnp.dot(hc.astype(jnp.bfloat16), w1_ref[...],
                preferred_element_type=jnp.float32) + b1_ref[...]
    z = jnp.maximum(z, 0.0)
    out = jnp.dot(z.astype(jnp.bfloat16), w2_ref[...],
                  preferred_element_type=jnp.float32) + b2_ref[...]

    # inter-layer ReLU on all but the last GNN layer (dropout is identity in eval mode)
    @pl.when(l < nl - 1)
    def _():
        h_sc[...] = jnp.maximum(out, 0.0)

    # final layer: gather masked nodes (one-hot matmul) + node_pred linear, fused in-kernel
    @pl.when(l == nl - 1)
    def _():
        h_masked = jnp.dot(mask_ref[...], out, preferred_element_type=jnp.float32)
        o_ref[...] = (jnp.dot(h_masked.astype(jnp.bfloat16), pw_ref[...],
                              preferred_element_type=jnp.float32) + pb_ref[...])


# ---------------------------------------------------------------------------
# pallas_call wrapper
# ---------------------------------------------------------------------------
def fused_gnn(fp, h0, gat, scat, mask_oh, e_emb):
    n_pad, d = h0.shape
    e_pad = gat.shape[0]
    m_pad = mask_oh.shape[0]
    n_layers = e_emb.shape[0]
    hdim = fp["w1"].shape[-1]
    p = fp["pred_w"].shape[-1]
    return pl.pallas_call(
        fused_gnn_kernel,
        out_shape=jax.ShapeDtypeStruct((m_pad, p), jnp.float32),
        grid=(n_layers,),
        in_specs=[
            pl.BlockSpec(memory_space=pltpu.MemorySpace.SMEM),        # eps1p (L,)
            pl.BlockSpec((n_pad, d), lambda l: (0, 0)),               # h0        (resident)
            pl.BlockSpec((e_pad, n_pad), lambda l: (0, 0)),           # gather    (resident)
            pl.BlockSpec((n_pad, e_pad), lambda l: (0, 0)),           # scatter   (resident)
            pl.BlockSpec((m_pad, n_pad), lambda l: (0, 0)),           # mask 1-hot(resident)
            pl.BlockSpec((None, e_pad, d), lambda l: (l, 0, 0)),      # bond emb per layer
            pl.BlockSpec((None, d, hdim), lambda l: (l, 0, 0)),       # w1 folded (bf16)
            pl.BlockSpec((None, 1, hdim), lambda l: (l, 0, 0)),       # b1 folded
            pl.BlockSpec((None, hdim, d), lambda l: (l, 0, 0)),       # w2 folded (bf16)
            pl.BlockSpec((None, 1, d), lambda l: (l, 0, 0)),          # b2 folded
            pl.BlockSpec((d, p), lambda l: (0, 0)),                   # pred_w    (resident)
            pl.BlockSpec((1, p), lambda l: (0, 0)),                   # pred_b    (resident)
        ],
        out_specs=pl.BlockSpec((m_pad, p), lambda l: (0, 0)),
        scratch_shapes=[pltpu.VMEM((n_pad, d), jnp.float32)],
        compiler_params=pltpu.CompilerParams(
            dimension_semantics=("arbitrary",)),                      # layer axis is sequential
    )(fp["eps1p"], h0, gat, scat, mask_oh, e_emb,
      fp["w1"], fp["b1"], fp["w2"], fp["b2"], fp["pred_w"], fp["pred_b"])


# ---------------------------------------------------------------------------
# Parameter construction (deterministic, synthetic) and host-side folding
# ---------------------------------------------------------------------------
def init_params(key, emb_dim=EMB_DIM, num_layers=NUM_LAYERS):
    atom_dims = get_atom_feature_dims()
    bond_dims = get_bond_feature_dims()
    keys = iter(jax.random.split(key, 256))

    def nrm(shape, scale=0.1):
        return scale * jax.random.normal(next(keys), shape, dtype=jnp.float32)

    params = {
        "atom_emb": [nrm((d, emb_dim)) for d in atom_dims],
        "layers": [],
        "pred_w": nrm((emb_dim, atom_dims[0])),
        "pred_b": nrm((1, atom_dims[0])),
    }
    for _ in range(num_layers):
        lp = {
            "bond_emb": [nrm((d, emb_dim)) for d in bond_dims],
            "eps": jnp.zeros((1, 1), jnp.float32),            # GIN eps init = 0
            "w1": nrm((emb_dim, 2 * emb_dim)),
            "b1": nrm((1, 2 * emb_dim)),
            # MLP-internal BatchNorm1d(2*emb_dim), fresh-module eval defaults
            "g1": jnp.ones((1, 2 * emb_dim), jnp.float32),
            "be1": jnp.zeros((1, 2 * emb_dim), jnp.float32),
            "m1": jnp.zeros((1, 2 * emb_dim), jnp.float32),
            "v1": jnp.ones((1, 2 * emb_dim), jnp.float32),
            "w2": nrm((2 * emb_dim, emb_dim)),
            "b2": nrm((1, emb_dim)),
            # outer BatchNorm1d(emb_dim)
            "g2": jnp.ones((1, emb_dim), jnp.float32),
            "be2": jnp.zeros((1, emb_dim), jnp.float32),
            "m2": jnp.zeros((1, emb_dim), jnp.float32),
            "v2": jnp.ones((1, emb_dim), jnp.float32),
        }
        params["layers"].append(lp)
    return params


def _fold_bn_into_linear(w, b, g, be, m, v):
    # eval-mode BN(y) = y*s + (be - m*s), s = g * rsqrt(v + eps)  -> fold into preceding Linear
    s = g * jax.lax.rsqrt(v + BN_EPS)
    return w * s, b * s + be - m * s


def prepare_fused_params(params):
    w1s, b1s, w2s, b2s, eps1p = [], [], [], [], []
    for lp in params["layers"]:
        w1f, b1f = _fold_bn_into_linear(lp["w1"], lp["b1"],
                                        lp["g1"], lp["be1"], lp["m1"], lp["v1"])
        w2f, b2f = _fold_bn_into_linear(lp["w2"], lp["b2"],
                                        lp["g2"], lp["be2"], lp["m2"], lp["v2"])
        w1s.append(w1f.astype(jnp.bfloat16))
        b1s.append(b1f)
        w2s.append(w2f.astype(jnp.bfloat16))
        b2s.append(b2f)
        eps1p.append(1.0 + lp["eps"][0, 0])

    n_out = get_atom_feature_dims()[0]            # 119
    pred_w = jnp.zeros((EMB_DIM, PRED_PAD), jnp.float32).at[:, :n_out].set(params["pred_w"])
    pred_b = jnp.zeros((1, PRED_PAD), jnp.float32).at[:, :n_out].set(params["pred_b"])
    return {
        "eps1p": jnp.stack(eps1p).astype(jnp.float32),        # (L,)
        "w1": jnp.stack(w1s),                                 # (L, D, H) bf16
        "b1": jnp.stack(b1s),                                 # (L, 1, H) f32
        "w2": jnp.stack(w2s),                                 # (L, H, D) bf16
        "b2": jnp.stack(b2s),                                 # (L, 1, D) f32
        "pred_w": pred_w.astype(jnp.bfloat16),                # (D, 128)  bf16, cols>=119 zero
        "pred_b": pred_b,                                     # (1, 128)  f32
    }


# ---------------------------------------------------------------------------
# Forward (embedding-lookup glue in plain JAX, fused hot path in one Pallas call)
# ---------------------------------------------------------------------------
def gnn_forward(params, fused, x_atom, edge_index, edge_attr, mask_idx):
    n = x_atom.shape[0]
    e = edge_attr.shape[0]
    m = mask_idx.shape[0]
    n_pad = _round_up(n, 128)   # lane-dense N axis for the one-hot matmuls
    e_pad = _round_up(e, 128)   # lane-dense E axis
    m_pad = _round_up(m, 8)
    src, dst = edge_index[0], edge_index[1]

    # AtomEncoder: sum of per-feature embedding lookups (glue)
    h0 = jnp.zeros((n, EMB_DIM), jnp.float32)
    for k, tab in enumerate(params["atom_emb"]):
        h0 = h0 + tab[x_atom[:, k]]
    h0 = jnp.pad(h0, ((0, n_pad - n), (0, 0)))

    # BondEncoder for ALL layers at once (edge_attr is layer-invariant) -> (L, E, D)
    e_embs = []
    for lp in params["layers"]:
        ee = jnp.zeros((e, EMB_DIM), jnp.float32)
        for k, tab in enumerate(lp["bond_emb"]):
            ee = ee + tab[edge_attr[:, k]]
        e_embs.append(ee)
    e_emb = jnp.pad(jnp.stack(e_embs), ((0, 0), (0, e_pad - e), (0, 0)))

    # dense one-hot gather (E,N) / scatter (N,E) / mask (M,N) matrices: exact, VMEM-resident
    # TODO(synk): for realistic graph sizes replace these dense O(N*E) matrices with a
    # sorted-edge segment-sum (scalar-prefetched per-node edge offsets) so aggregation is O(E*D).
    gat = jnp.zeros((e_pad, n_pad), jnp.float32).at[jnp.arange(e), src].set(1.0)
    scat = jnp.zeros((n_pad, e_pad), jnp.float32).at[dst, jnp.arange(e)].set(1.0)
    mask_oh = jnp.zeros((m_pad, n_pad), jnp.float32).at[jnp.arange(m), mask_idx].set(1.0)

    # single fused kernel: 5 GIN layers + masked-node gather + node_pred linear
    logits = fused_gnn(fused, h0, gat, scat, mask_oh, e_emb)
    return logits[:m, :get_atom_feature_dims()[0]]


# TODO(synk): dropout (drop_ratio in GNN_node) is identity here because the forward is
# reproduced in eval mode; training-mode dropout / BN batch statistics are not implemented.

if __name__ == "__main__":
    key = jax.random.PRNGKey(0)
    k_par, k_x, k_e, k_src, k_dst = jax.random.split(key, 5)

    N_NODES, N_EDGES, N_MASK = 16, 32, 4
    atom_dims = np.array(get_atom_feature_dims())
    bond_dims = np.array(get_bond_feature_dims())

    params = init_params(k_par)
    fused = prepare_fused_params(params)

    # synthetic molecular graph
    x_atom = jax.random.randint(
        k_x, (N_NODES, len(atom_dims)), 0, jnp.asarray(atom_dims), dtype=jnp.int32)
    edge_attr = jax.random.randint(
        k_e, (N_EDGES, len(bond_dims)), 0, jnp.asarray(bond_dims), dtype=jnp.int32)
    edge_src = jax.random.randint(k_src, (N_EDGES,), 0, N_NODES, dtype=jnp.int32)
    edge_dst = jax.random.randint(k_dst, (N_EDGES,), 0, N_NODES, dtype=jnp.int32)
    edge_index = jnp.stack([edge_src, edge_dst], axis=0)          # (2, E)

    # node_mask (boolean over nodes) -> static indices of masked nodes
    node_mask = np.zeros(N_NODES, dtype=bool)
    node_mask[[1, 5, 9, 12]] = True
    mask_idx = jnp.asarray(np.nonzero(node_mask)[0], dtype=jnp.int32)

    out = jax.jit(gnn_forward)(params, fused, x_atom, edge_index, edge_attr, mask_idx)
    jax.block_until_ready(out)
    assert out.shape == (N_MASK, int(atom_dims[0]))
    print("KERNEL_OK")
</pallas_src>

<mosaic_0001>
module attributes {stable_mosaic.version = 11 : i64} {
  func.func @fused_gnn_kernel(%arg0: i32, %arg1: memref<5xf32, #tpu.memory_space<smem>>, %arg2: memref<128x128xf32, #tpu.memory_space<vmem>>, %arg3: memref<128x128xf32, #tpu.memory_space<vmem>>, %arg4: memref<128x128xf32, #tpu.memory_space<vmem>>, %arg5: memref<8x128xf32, #tpu.memory_space<vmem>>, %arg6: memref<1x128x128xf32, #tpu.memory_space<vmem>>, %arg7: memref<1x128x256xbf16, #tpu.memory_space<vmem>>, %arg8: memref<1x1x256xf32, #tpu.memory_space<vmem>>, %arg9: memref<1x256x128xbf16, #tpu.memory_space<vmem>>, %arg10: memref<1x1x128xf32, #tpu.memory_space<vmem>>, %arg11: memref<128x128xbf16, #tpu.memory_space<vmem>>, %arg12: memref<1x128xf32, #tpu.memory_space<vmem>>, %arg13: memref<8x128xf32, #tpu.memory_space<vmem>>, %arg14: memref<128x128xf32, #tpu.memory_space<vmem>>) attributes {dimension_semantics = [#tpu.dimension_semantics<arbitrary>], iteration_bounds = array<i64: 5>, scalar_prefetch = 0 : i64, scratch_operands = 1 : i64, tpu.core_type = #tpu.core_type<tc>, window_params = [{transform_indices = @transform_0, window_bounds = array<i64: 5>}, {pipeline_mode = #tpu.pipeline_mode<synchronous>, transform_indices = @transform_1, window_bounds = array<i64: 128, 128>}, {pipeline_mode = #tpu.pipeline_mode<synchronous>, transform_indices = @transform_2, window_bounds = array<i64: 128, 128>}, {pipeline_mode = #tpu.pipeline_mode<synchronous>, transform_indices = @transform_3, window_bounds = array<i64: 128, 128>}, {pipeline_mode = #tpu.pipeline_mode<synchronous>, transform_indices = @transform_4, window_bounds = array<i64: 8, 128>}, {transform_indices = @transform_5, window_bounds = array<i64: 1, 128, 128>}, {transform_indices = @transform_6, window_bounds = array<i64: 1, 128, 256>}, {transform_indices = @transform_7, window_bounds = array<i64: 1, 1, 256>}, {transform_indices = @transform_8, window_bounds = array<i64: 1, 256, 128>}, {transform_indices = @transform_9, window_bounds = array<i64: 1, 1, 128>}, {pipeline_mode = #tpu.pipeline_mode<synchronous>, transform_indices = @transform_10, window_bounds = array<i64: 128, 128>}, {pipeline_mode = #tpu.pipeline_mode<synchronous>, transform_indices = @transform_11, window_bounds = array<i64: 1, 128>}, {pipeline_mode = #tpu.pipeline_mode<synchronous>, transform_indices = @transform_12, window_bounds = array<i64: 8, 128>}]} {
    %c0_i32 = arith.constant 0 : i32
    %0 = arith.cmpi eq, %arg0, %c0_i32 : i32
    %1 = arith.extui %0 : i1 to i32
    %c0_i32_0 = arith.constant 0 : i32
    %2 = arith.cmpi ne, %1, %c0_i32_0 : i32
    scf.if %2 {
      %c0_29 = arith.constant 0 : index
      %c0_30 = arith.constant 0 : index
      %42 = vector.load %arg2[%c0_29, %c0_30] : memref<128x128xf32, #tpu.memory_space<vmem>>, vector<128x128xf32>
      %c0_31 = arith.constant 0 : index
      %c0_32 = arith.constant 0 : index
      %43 = vector.load %arg14[%c0_31, %c0_32] : memref<128x128xf32, #tpu.memory_space<vmem>>, vector<128x128xf32>
      tpu.vector_store %arg14[%c0_31, %c0_32], %42 {strides = array<i32>} : memref<128x128xf32, #tpu.memory_space<vmem>>, vector<128x128xf32>,
    } else {
    }
    %c0 = arith.constant 0 : index
    %c0_1 = arith.constant 0 : index
    %3 = vector.load %arg14[%c0, %c0_1] : memref<128x128xf32, #tpu.memory_space<vmem>>, vector<128x128xf32>
    %c0_2 = arith.constant 0 : index
    %c0_3 = arith.constant 0 : index
    %4 = vector.load %arg3[%c0_2, %c0_3] : memref<128x128xf32, #tpu.memory_space<vmem>>, vector<128x128xf32>
    %cst = arith.constant dense<0.000000e+00> : vector<128x128xf32>
    %5 = tpu.matmul %4, %3, %cst {dimension_numbers = #tpu.dot_dimension_numbers<[1], [0], [0], [1], [0, 0, 1, 1], [], []>} : vector<128x128xf32>, vector<128x128xf32>, vector<128x128xf32> -> vector<128x128xf32>
    %c0_4 = arith.constant 0 : index
    %c0_5 = arith.constant 0 : index
    %c0_6 = arith.constant 0 : index
    %6 = vector.load %arg6[%c0_4, %c0_5, %c0_6] : memref<1x128x128xf32, #tpu.memory_space<vmem>>, vector<1x128x128xf32>
    %7 = vector.shape_cast %6 : vector<1x128x128xf32> to vector<128x128xf32>
    %8 = arith.addf %5, %7 : vector<128x128xf32>
    %cst_7 = arith.constant 0.000000e+00 : f32
    %9 = vector.broadcast %cst_7 : f32 to vector<128x128xf32>
    %10 = arith.maximumf %8, %9 : vector<128x128xf32>
    %c0_8 = arith.constant 0 : index
    %c0_9 = arith.constant 0 : index
    %11 = vector.load %arg4[%c0_8, %c0_9] : memref<128x128xf32, #tpu.memory_space<vmem>>, vector<128x128xf32>
    %cst_10 = arith.constant dense<0.000000e+00> : vector<128x128xf32>
    %12 = tpu.matmul %11, %10, %cst_10 {dimension_numbers = #tpu.dot_dimension_numbers<[1], [0], [0], [1], [0, 0, 1, 1], [], []>} : vector<128x128xf32>, vector<128x128xf32>, vector<128x128xf32> -> vector<128x128xf32>
    %13 = arith.index_cast %arg0 : i32 to index
    %14 = memref.load %arg1[%13] : memref<5xf32, #tpu.memory_space<smem>>
    %15 = vector.broadcast %14 : f32 to vector<128x128xf32>
    %16 = arith.mulf %15, %3 : vector<128x128xf32>
    %17 = arith.addf %16, %12 : vector<128x128xf32>
    %18 = arith.truncf %17 : vector<128x128xf32> to vector<128x128xbf16>
    %c0_11 = arith.constant 0 : index
    %c0_12 = arith.constant 0 : index
    %c0_13 = arith.constant 0 : index
    %19 = vector.load %arg7[%c0_11, %c0_12, %c0_13] : memref<1x128x256xbf16, #tpu.memory_space<vmem>>, vector<1x128x256xbf16>
    %20 = vector.shape_cast %19 : vector<1x128x256xbf16> to vector<128x256xbf16>
    %cst_14 = arith.constant dense<0.000000e+00> : vector<128x256xf32>
    %21 = tpu.matmul %18, %20, %cst_14 {dimension_numbers = #tpu.dot_dimension_numbers<[1], [0], [0], [1], [0, 0, 1, 1], [], []>} : vector<128x128xbf16>, vector<128x256xbf16>, vector<128x256xf32> -> vector<128x256xf32>
    %c0_15 = arith.constant 0 : index
    %c0_16 = arith.constant 0 : index
    %c0_17 = arith.constant 0 : index
    %22 = vector.load %arg8[%c0_15, %c0_16, %c0_17] : memref<1x1x256xf32, #tpu.memory_space<vmem>>, vector<1x1x256xf32>
    %23 = vector.shape_cast %22 : vector<1x1x256xf32> to vector<1x256xf32>
    %24 = vector.broadcast %23 : vector<1x256xf32> to vector<128x256xf32>
    %25 = arith.addf %21, %24 : vector<128x256xf32>
    %cst_18 = arith.constant 0.000000e+00 : f32
    %26 = vector.broadcast %cst_18 : f32 to vector<128x256xf32>
    %27 = arith.maximumf %25, %26 : vector<128x256xf32>
    %28 = arith.truncf %27 : vector<128x256xf32> to vector<128x256xbf16>
    %c0_19 = arith.constant 0 : index
    %c0_20 = arith.constant 0 : index
    %c0_21 = arith.constant 0 : index
    %29 = vector.load %arg9[%c0_19, %c0_20, %c0_21] : memref<1x256x128xbf16, #tpu.memory_space<vmem>>, vector<1x256x128xbf16>
    %30 = vector.shape_cast %29 : vector<1x256x128xbf16> to vector<256x128xbf16>
    %cst_22 = arith.constant dense<0.000000e+00> : vector<128x128xf32>
    %31 = tpu.matmul %28, %30, %cst_22 {dimension_numbers = #tpu.dot_dimension_numbers<[1], [0], [0], [1], [0, 0, 1, 1], [], []>} : vector<128x256xbf16>, vector<256x128xbf16>, vector<128x128xf32> -> vector<128x128xf32>
    %c0_23 = arith.constant 0 : index
    %c0_24 = arith.constant 0 : index
    %c0_25 = arith.constant 0 : index
    %32 = vector.load %arg10[%c0_23, %c0_24, %c0_25] : memref<1x1x128xf32, #tpu.memory_space<vmem>>, vector<1x1x128xf32>
    %33 = vector.shape_cast %32 : vector<1x1x128xf32> to vector<1x128xf32>
    %34 = vector.broadcast %33 : vector<1x128xf32> to vector<128x128xf32>
    %35 = arith.addf %31, %34 : vector<128x128xf32>
    %c4_i32 = arith.constant 4 : i32
    %36 = arith.cmpi slt, %arg0, %c4_i32 : i32
    %37 = arith.extui %36 : i1 to i32
    %c0_i32_26 = arith.constant 0 : i32
    %38 = arith.cmpi ne, %37, %c0_i32_26 : i32
    scf.if %38 {
      %cst_29 = arith.constant 0.000000e+00 : f32
      %42 = vector.broadcast %cst_29 : f32 to vector<128x128xf32>
      %43 = arith.maximumf %35, %42 : vector<128x128xf32>
      %c0_30 = arith.constant 0 : index
      %c0_31 = arith.constant 0 : index
      %44 = vector.load %arg14[%c0_30, %c0_31] : memref<128x128xf32, #tpu.memory_space<vmem>>, vector<128x128xf32>
      tpu.vector_store %arg14[%c0_30, %c0_31], %43 {strides = array<i32>} : memref<128x128xf32, #tpu.memory_space<vmem>>, vector<128x128xf32>,
    } else {
    }
    %c4_i32_27 = arith.constant 4 : i32
    %39 = arith.cmpi eq, %arg0, %c4_i32_27 : i32
    %40 = arith.extui %39 : i1 to i32
    %c0_i32_28 = arith.constant 0 : i32
    %41 = arith.cmpi ne, %40, %c0_i32_28 : i32
    scf.if %41 {
      %c0_29 = arith.constant 0 : index
      %c0_30 = arith.constant 0 : index
      %42 = vector.load %arg5[%c0_29, %c0_30] : memref<8x128xf32, #tpu.memory_space<vmem>>, vector<8x128xf32>
      %cst_31 = arith.constant dense<0.000000e+00> : vector<8x128xf32>
      %43 = tpu.matmul %42, %35, %cst_31 {dimension_numbers = #tpu.dot_dimension_numbers<[1], [0], [0], [1], [0, 0, 1, 1], [], []>} : vector<8x128xf32>, vector<128x128xf32>, vector<8x128xf32> -> vector<8x128xf32>
      %44 = arith.truncf %43 : vector<8x128xf32> to vector<8x128xbf16>
      %c0_32 = arith.constant 0 : index
      %c0_33 = arith.constant 0 : index
      %45 = vector.load %arg11[%c0_32, %c0_33] : memref<128x128xbf16, #tpu.memory_space<vmem>>, vector<128x128xbf16>
      %cst_34 = arith.constant dense<0.000000e+00> : vector<8x128xf32>
      %46 = tpu.matmul %44, %45, %cst_34 {dimension_numbers = #tpu.dot_dimension_numbers<[1], [0], [0], [1], [0, 0, 1, 1], [], []>} : vector<8x128xbf16>, vector<128x128xbf16>, vector<8x128xf32> -> vector<8x128xf32>
      %c0_35 = arith.constant 0 : index
      %c0_36 = arith.constant 0 : index
      %47 = vector.load %arg12[%c0_35, %c0_36] : memref<1x128xf32, #tpu.memory_space<vmem>>, vector<1x128xf32>
      %48 = vector.broadcast %47 : vector<1x128xf32> to vector<8x128xf32>
      %49 = arith.addf %46, %48 : vector<8x128xf32>
      %c0_37 = arith.constant 0 : index
      %c0_38 = arith.constant 0 : index
      %50 = vector.load %arg13[%c0_37, %c0_38] : memref<8x128xf32, #tpu.memory_space<vmem>>, vector<8x128xf32>
      tpu.vector_store %arg13[%c0_37, %c0_38], %49 {strides = array<i32>} : memref<8x128xf32, #tpu.memory_space<vmem>>, vector<8x128xf32>,
    } else {
    }
    return
  }
  func.func @transform_0(%arg0: i32) -> i32 {
    %c0_i32 = arith.constant 0 : i32
    %c0_i32_0 = arith.constant 0 : i32
    return %c0_i32 : i32
  }
  func.func @transform_1(%arg0: i32) -> (i32, i32) {
    %c0_i32 = arith.constant 0 : i32
    %c0_i32_0 = arith.constant 0 : i32
    %c0_i32_1 = arith.constant 0 : i32
    return %c0_i32, %c0_i32_0 : i32, i32
  }
  func.func @transform_2(%arg0: i32) -> (i32, i32) {
    %c0_i32 = arith.constant 0 : i32
    %c0_i32_0 = arith.constant 0 : i32
    %c0_i32_1 = arith.constant 0 : i32
    return %c0_i32, %c0_i32_0 : i32, i32
  }
  func.func @transform_3(%arg0: i32) -> (i32, i32) {
    %c0_i32 = arith.constant 0 : i32
    %c0_i32_0 = arith.constant 0 : i32
    %c0_i32_1 = arith.constant 0 : i32
    return %c0_i32, %c0_i32_0 : i32, i32
  }
  func.func @transform_4(%arg0: i32) -> (i32, i32) {
    %c0_i32 = arith.constant 0 : i32
    %c0_i32_0 = arith.constant 0 : i32
    %c0_i32_1 = arith.constant 0 : i32
    return %c0_i32, %c0_i32_0 : i32, i32
  }
  func.func @transform_5(%arg0: i32) -> (i32, i32, i32) {
    %c0_i32 = arith.constant 0 : i32
    %c0_i32_0 = arith.constant 0 : i32
    %c0_i32_1 = arith.constant 0 : i32
    return %arg0, %c0_i32, %c0_i32_0 : i32, i32, i32
  }
  func.func @transform_6(%arg0: i32) -> (i32, i32, i32) {
    %c0_i32 = arith.constant 0 : i32
    %c0_i32_0 = arith.constant 0 : i32
    %c0_i32_1 = arith.constant 0 : i32
    return %arg0, %c0_i32, %c0_i32_0 : i32, i32, i32
  }
  func.func @transform_7(%arg0: i32) -> (i32, i32, i32) {
    %c0_i32 = arith.constant 0 : i32
    %c0_i32_0 = arith.constant 0 : i32
    %c0_i32_1 = arith.constant 0 : i32
    return %arg0, %c0_i32, %c0_i32_0 : i32, i32, i32
  }
  func.func @transform_8(%arg0: i32) -> (i32, i32, i32) {
    %c0_i32 = arith.constant 0 : i32
    %c0_i32_0 = arith.constant 0 : i32
    %c0_i32_1 = arith.constant 0 : i32
    return %arg0, %c0_i32, %c0_i32_0 : i32, i32, i32
  }
  func.func @transform_9(%arg0: i32) -> (i32, i32, i32) {
    %c0_i32 = arith.constant 0 : i32
    %c0_i32_0 = arith.constant 0 : i32
    %c0_i32_1 = arith.constant 0 : i32
    return %arg0, %c0_i32, %c0_i32_0 : i32, i32, i32
  }
  func.func @transform_10(%arg0: i32) -> (i32, i32) {
    %c0_i32 = arith.constant 0 : i32
    %c0_i32_0 = arith.constant 0 : i32
    %c0_i32_1 = arith.constant 0 : i32
    return %c0_i32, %c0_i32_0 : i32, i32
  }
  func.func @transform_11(%arg0: i32) -> (i32, i32) {
    %c0_i32 = arith.constant 0 : i32
    %c0_i32_0 = arith.constant 0 : i32
    %c0_i32_1 = arith.constant 0 : i32
    return %c0_i32, %c0_i32_0 : i32, i32
  }
  func.func @transform_12(%arg0: i32) -> (i32, i32) {
    %c0_i32 = arith.constant 0 : i32
    %c0_i32_0 = arith.constant 0 : i32
    %c0_i32_1 = arith.constant 0 : i32
    return %c0_i32, %c0_i32_0 : i32, i32
  }
}

</mosaic_0001>

<llo_original>
// kernel: gnn_forward.1
$region0: #{gnn_forward.1}
  #allocation0 [shape = 'u32[]', space=smem, size = 0x4, offset = 0x4, fixed_abs, tag = 'smem constant byte address 0x4 - core index']
  #allocation1 [shape = 'u32[72,128]{1,0:T(1,128)}', space=vmem, size = 0x9000, scoped, tag = 'internal scratch']
  #allocation2 [shape = 'f32[128,128]{1,0:T(8,128)}', space=vmem, size = 0x10000, scoped, tag = 'scratch operand']
  %s0 = inlined_call_operand.vmem [shape: f32[5], index: 0, kind: input, shape index: {}]
  %s1 = inlined_call_operand.vmem [shape: f32[128,128], index: 1, kind: input, shape index: {}]
  %s2 = inlined_call_operand.vmem [shape: f32[128,128], index: 2, kind: input, shape index: {}]
  %s3 = inlined_call_operand.vmem [shape: f32[128,128], index: 3, kind: input, shape index: {}]
  %s4 = inlined_call_operand.vmem [shape: f32[8,128], index: 4, kind: input, shape index: {}]
  %s5 = inlined_call_operand.vmem [shape: f32[5,128,128], index: 5, kind: input, shape index: {}]
  %s6 = inlined_call_operand.vmem [shape: bf16[5,128,256], index: 6, kind: input, shape index: {}]
  %s7 = inlined_call_operand.vmem [shape: f32[5,1,256], index: 7, kind: input, shape index: {}]
  %s8 = inlined_call_operand.vmem [shape: bf16[5,256,128], index: 8, kind: input, shape index: {}]
  %s9 = inlined_call_operand.vmem [shape: f32[5,1,128], index: 9, kind: input, shape index: {}]
  %s10 = inlined_call_operand.vmem [shape: bf16[128,128], index: 10, kind: input, shape index: {}]
  %s11 = inlined_call_operand.vmem [shape: f32[1,128], index: 11, kind: input, shape index: {}]
  %s12 = inlined_call_operand.vmem [shape: f32[8,128], index: 12, kind: output, shape index: {}]
  %s13 = sld [smem:[#allocation0]]
  $region97: #{gnn_forward.1} parent=0
    _
  %s15 = ssub.s32 1, %s13
  %s16 = scalar_select 0, %s15, %s13
  $region1: #{gnn_forward.1} parent=0
    #allocation3 [shape = 'u8[512]{0}', space=smem, size = 0x200, scoped, tag = 'input window, operand 0, single buffered']
    #allocation4 [shape = 's32[2]{0}', space=sflag, size = 0x8, scoped, tag = 'scoped memory for gnn_forward.1']
    %17 = vsyncpa [#allocation4], 0
    loop: start=0, step=1, limit=7
    $region2: #{gnn_forward.1} parent=1 // loop_pre_header
      _
    $region3: #{gnn_forward.1} parent=1 // loop_header
      %s19 = sphi 0, %s23
      %p20 = scmp.ge.s32.totalorder %s19, 7
      %s27 = sphi 0, %s27
      %s29 = sphi 0, %s27
      %s30 = sphi 0, %s29
      %s44 = sphi 0, %s30
      %s48 = sphi 0, %s48
      %s50 = sphi 0, %s48
      %s51 = sphi 0, %s50
      %s65 = sphi 0, %s51
      %s69 = sphi 0, %s69
      %s71 = sphi 0, %s69
      %s72 = sphi 0, %s71
      %s86 = sphi 0, %s72
      %s90 = sphi 0, %s90
      %s92 = sphi 0, %s90
      %s93 = sphi 0, %s92
      %s107 = sphi 0, %s93
      %s111 = sphi 0, %s111
      %s113 = sphi 0, %s111
      %s114 = sphi 0, %s113
      %s128 = sphi 0, %s114
      %s134 = sphi 0, %s136
      %s137 = sphi 0, %s134
      %s138 = sphi 0, %s137
      %s154 = sphi 0, %s138
      %s160 = sphi 0, %s162
      %s163 = sphi 0, %s160
      %s164 = sphi 0, %s163
      %s180 = sphi 0, %s164
      %s186 = sphi 0, %s188
      %s189 = sphi 0, %s186
      %s190 = sphi 0, %s189
      %s206 = sphi 0, %s190
      %s212 = sphi 0, %s214
      %s215 = sphi 0, %s212
      %s216 = sphi 0, %s215
      %s232 = sphi 0, %s216
      %s238 = sphi 0, %s240
      %s241 = sphi 0, %s238
      %s242 = sphi 0, %s241
      %s258 = sphi 0, %s242
      %s262 = sphi 0, %s262
      %s264 = sphi 0, %s262
      %s265 = sphi 0, %s264
      %s279 = sphi 0, %s265
      %s283 = sphi 0, %s283
      %s285 = sphi 0, %s283
      %s286 = sphi 0, %s285
      %s300 = sphi 0, %s286
      %s304 = sphi 0, %s304
      %s306 = sphi 0, %s304
      %s307 = sphi 0, %s306
      %s321 = sphi 0, %s307
    $region4: #{gnn_forward.1} parent=1 // loop_header_branch
      %22 = sbr.rel (%p20) target = $region8
    $region5: #{gnn_forward.1} parent=1 // loop_body
      %s24 = ssub.s32 %s19, 1
      %s25 = ssub.s32 %s19, 2
      %s26 = sadd.s32 %s19, 1
      %s28 = sadd.s32 %s27, 1
      %p31 = scmp.eq.s32.totalorder %s19, 4
      %p32 = scmp.ne.s32.totalorder %s27, %s29
      %p33 = scmp.eq.s32.totalorder %s19, 0
      %p34 = por %p32, %p33
      %p35 = scmp.ne.s32.totalorder %s27, %s29
      %p36 = scmp.eq.s32.totalorder %s24, 4
      %p37 = por %p35, %p36
      %p38 = scmp.ne.s32.totalorder %s29, %s30
      %p39 = scmp.eq.s32.totalorder %s24, 0
      %p40 = por %p38, %p39
      %p41 = scmp.ne.s32.totalorder %s29, %s30
      %p42 = scmp.eq.s32.totalorder %s25, 4
      %p43 = por %p41, %p42
      %p45 = scmp.ne.s32.totalorder %s30, %s44
      %p46 = scmp.eq.s32.totalorder %s25, 0
      %p47 = por %p45, %p46
      %s49 = sadd.s32 %s48, 1
      %p52 = scmp.eq.s32.totalorder %s19, 4
      %p53 = scmp.ne.s32.totalorder %s48, %s50
      %p54 = scmp.eq.s32.totalorder %s19, 0
      %p55 = por %p53, %p54
      %p56 = scmp.ne.s32.totalorder %s48, %s50
      %p57 = scmp.eq.s32.totalorder %s24, 4
      %p58 = por %p56, %p57
      %p59 = scmp.ne.s32.totalorder %s50, %s51
      %p60 = scmp.eq.s32.totalorder %s24, 0
      %p61 = por %p59, %p60
      %p62 = scmp.ne.s32.totalorder %s50, %s51
      %p63 = scmp.eq.s32.totalorder %s25, 4
      %p64 = por %p62, %p63
      %p66 = scmp.ne.s32.totalorder %s51, %s65
      %p67 = scmp.eq.s32.totalorder %s25, 0
      %p68 = por %p66, %p67
      %s70 = sadd.s32 %s69, 1
      %p73 = scmp.eq.s32.totalorder %s19, 4
      %p74 = scmp.ne.s32.totalorder %s69, %s71
      %p75 = scmp.eq.s32.totalorder %s19, 0
      %p76 = por %p74, %p75
      %p77 = scmp.ne.s32.totalorder %s69, %s71
      %p78 = scmp.eq.s32.totalorder %s24, 4
      %p79 = por %p77, %p78
      %p80 = scmp.ne.s32.totalorder %s71, %s72
      %p81 = scmp.eq.s32.totalorder %s24, 0
      %p82 = por %p80, %p81
      %p83 = scmp.ne.s32.totalorder %s71, %s72
      %p84 = scmp.eq.s32.totalorder %s25, 4
      %p85 = por %p83, %p84
      %p87 = scmp.ne.s32.totalorder %s72, %s86
      %p88 = scmp.eq.s32.totalorder %s25, 0
      %p89 = por %p87, %p88
      %s91 = sadd.s32 %s90, 1
      %p94 = scmp.eq.s32.totalorder %s19, 4
      %p95 = scmp.ne.s32.totalorder %s90, %s92
      %p96 = scmp.eq.s32.totalorder %s19, 0
      %p97 = por %p95, %p96
      %p98 = scmp.ne.s32.totalorder %s90, %s92
      %p99 = scmp.eq.s32.totalorder %s24, 4
      %p100 = por %p98, %p99
      %p101 = scmp.ne.s32.totalorder %s92, %s93
      %p102 = scmp.eq.s32.totalorder %s24, 0
      %p103 = por %p101, %p102
      %p104 = scmp.ne.s32.totalorder %s92, %s93
      %p105 = scmp.eq.s32.totalorder %s25, 4
      %p106 = por %p104, %p105
      %p108 = scmp.ne.s32.totalorder %s93, %s107
      %p109 = scmp.eq.s32.totalorder %s25, 0
      %p110 = por %p108, %p109
      %s112 = sadd.s32 %s111, 1
      %p115 = scmp.eq.s32.totalorder %s19, 4
      %p116 = scmp.ne.s32.totalorder %s111, %s113
      %p117 = scmp.eq.s32.totalorder %s19, 0
      %p118 = por %p116, %p117
      %p119 = scmp.ne.s32.totalorder %s111, %s113
      %p120 = scmp.eq.s32.totalorder %s24, 4
      %p121 = por %p119, %p120
      %p122 = scmp.ne.s32.totalorder %s113, %s114
      %p123 = scmp.eq.s32.totalorder %s24, 0
      %p124 = por %p122, %p123
      %p125 = scmp.ne.s32.totalorder %s113, %s114
      %p126 = scmp.eq.s32.totalorder %s25, 4
      %p127 = por %p125, %p126
      %p129 = scmp.ne.s32.totalorder %s114, %s128
      %p130 = scmp.eq.s32.totalorder %s25, 0
      %p131 = por %p129, %p130
      %s132 = ssub.s32 %s19, %s26
      %p133 = scmp.eq.s32.totalorder %s132, 0
      %s135 = sadd.s32 %s134, 1
      %s136 = scalar_select %p133, %s134, %s135
      %p139 = pneg %p133
      %p140 = scmp.eq.s32.totalorder %s19, 4
      %p141 = por %p139, %p140
      %p142 = scmp.ne.s32.totalorder %s134, %s137
      %p143 = scmp.eq.s32.totalorder %s19, 0
      %p144 = por %p142, %p143
      %p145 = scmp.ne.s32.totalorder %s134, %s137
      %p146 = scmp.eq.s32.totalorder %s24, 4
      %p147 = por %p145, %p146
      %p148 = scmp.ne.s32.totalorder %s137, %s138
      %p149 = scmp.eq.s32.totalorder %s24, 0
      %p150 = por %p148, %p149
      %p151 = scmp.ne.s32.totalorder %s137, %s138
      %p152 = scmp.eq.s32.totalorder %s25, 4
      %p153 = por %p151, %p152
      %p155 = scmp.ne.s32.totalorder %s138, %s154
      %p156 = scmp.eq.s32.totalorder %s25, 0
      %p157 = por %p155, %p156
      %s158 = ssub.s32 %s19, %s26
      %p159 = scmp.eq.s32.totalorder %s158, 0
      %s161 = sadd.s32 %s160, 1
      %s162 = scalar_select %p159, %s160, %s161
      %p165 = pneg %p159
      %p166 = scmp.eq.s32.totalorder %s19, 4
      %p167 = por %p165, %p166
      %p168 = scmp.ne.s32.totalorder %s160, %s163
      %p169 = scmp.eq.s32.totalorder %s19, 0
      %p170 = por %p168, %p169
      %p171 = scmp.ne.s32.totalorder %s160, %s163
      %p172 = scmp.eq.s32.totalorder %s24, 4
      %p173 = por %p171, %p172
      %p174 = scmp.ne.s32.totalorder %s163, %s164
      %p175 = scmp.eq.s32.totalorder %s24, 0
      %p176 = por %p174, %p175
      %p177 = scmp.ne.s32.totalorder %s163, %s164
      %p178 = scmp.eq.s32.totalorder %s25, 4
      %p179 = por %p177, %p178
      %p181 = scmp.ne.s32.totalorder %s164, %s180
      %p182 = scmp.eq.s32.totalorder %s25, 0
      %p183 = por %p181, %p182
      %s184 = ssub.s32 %s19, %s26
      %p185 = scmp.eq.s32.totalorder %s184, 0
      %s187 = sadd.s32 %s186, 1
      %s188 = scalar_select %p185, %s186, %s187
      %p191 = pneg %p185
      %p192 = scmp.eq.s32.totalorder %s19, 4
      %p193 = por %p191, %p192
      %p194 = scmp.ne.s32.totalorder %s186, %s189
      %p195 = scmp.eq.s32.totalorder %s19, 0
      %p196 = por %p194, %p195
      %p197 = scmp.ne.s32.totalorder %s186, %s189
      %p198 = scmp.eq.s32.totalorder %s24, 4
      %p199 = por %p197, %p198
      %p200 = scmp.ne.s32.totalorder %s189, %s190
      %p201 = scmp.eq.s32.totalorder %s24, 0
      %p202 = por %p200, %p201
      %p203 = scmp.ne.s32.totalorder %s189, %s190
      %p204 = scmp.eq.s32.totalorder %s25, 4
      %p205 = por %p203, %p204
      %p207 = scmp.ne.s32.totalorder %s190, %s206
      %p208 = scmp.eq.s32.totalorder %s25, 0
      %p209 = por %p207, %p208
      %s210 = ssub.s32 %s19, %s26
      %p211 = scmp.eq.s32.totalorder %s210, 0
      %s213 = sadd.s32 %s212, 1
      %s214 = scalar_select %p211, %s212, %s213
      %p217 = pneg %p211
      %p218 = scmp.eq.s32.totalorder %s19, 4
      %p219 = por %p217, %p218
      %p220 = scmp.ne.s32.totalorder %s212, %s215
      %p221 = scmp.eq.s32.totalorder %s19, 0
      %p222 = por %p220, %p221
      %p223 = scmp.ne.s32.totalorder %s212, %s215
      %p224 = scmp.eq.s32.totalorder %s24, 4
      %p225 = por %p223, %p224
      %p226 = scmp.ne.s32.totalorder %s215, %s216
      %p227 = scmp.eq.s32.totalorder %s24, 0
      %p228 = por %p226, %p227
      %p229 = scmp.ne.s32.totalorder %s215, %s216
      %p230 = scmp.eq.s32.totalorder %s25, 4
      %p231 = por %p229, %p230
      %p233 = scmp.ne.s32.totalorder %s216, %s232
      %p234 = scmp.eq.s32.totalorder %s25, 0
      %p235 = por %p233, %p234
      %s236 = ssub.s32 %s19, %s26
      %p237 = scmp.eq.s32.totalorder %s236, 0
      %s239 = sadd.s32 %s238, 1
      %s240 = scalar_select %p237, %s238, %s239
      %p243 = pneg %p237
      %p244 = scmp.eq.s32.totalorder %s19, 4
      %p245 = por %p243, %p244
      %p246 = scmp.ne.s32.totalorder %s238, %s241
      %p247 = scmp.eq.s32.totalorder %s19, 0
      %p248 = por %p246, %p247
      %p249 = scmp.ne.s32.totalorder %s238, %s241
      %p250 = scmp.eq.s32.totalorder %s24, 4
      %p251 = por %p249, %p250
      %p252 = scmp.ne.s32.totalorder %s241, %s242
      %p253 = scmp.eq.s32.totalorder %s24, 0
      %p254 = por %p252, %p253
      %p255 = scmp.ne.s32.totalorder %s241, %s242
      %p256 = scmp.eq.s32.totalorder %s25, 4
      %p257 = por %p255, %p256
      %p259 = scmp.ne.s32.totalorder %s242, %s258
      %p260 = scmp.eq.s32.totalorder %s25, 0
      %p261 = por %p259, %p260
      %s263 = sadd.s32 %s262, 1
      %p266 = scmp.eq.s32.totalorder %s19, 4
      %p267 = scmp.ne.s32.totalorder %s262, %s264
      %p268 = scmp.eq.s32.totalorder %s19, 0
      %p269 = por %p267, %p268
      %p270 = scmp.ne.s32.totalorder %s262, %s264
      %p271 = scmp.eq.s32.totalorder %s24, 4
      %p272 = por %p270, %p271
      %p273 = scmp.ne.s32.totalorder %s264, %s265
      %p274 = scmp.eq.s32.totalorder %s24, 0
      %p275 = por %p273, %p274
      %p276 = scmp.ne.s32.totalorder %s264, %s265
      %p277 = scmp.eq.s32.totalorder %s25, 4
      %p278 = por %p276, %p277
      %p280 = scmp.ne.s32.totalorder %s265, %s279
      %p281 = scmp.eq.s32.totalorder %s25, 0
      %p282 = por %p280, %p281
      %s284 = sadd.s32 %s283, 1
      %p287 = scmp.eq.s32.totalorder %s19, 4
      %p288 = scmp.ne.s32.totalorder %s283, %s285
      %p289 = scmp.eq.s32.totalorder %s19, 0
      %p290 = por %p288, %p289
      %p291 = scmp.ne.s32.totalorder %s283, %s285
      %p292 = scmp.eq.s32.totalorder %s24, 4
      %p293 = por %p291, %p292
      %p294 = scmp.ne.s32.totalorder %s285, %s286
      %p295 = scmp.eq.s32.totalorder %s24, 0
      %p296 = por %p294, %p295
      %p297 = scmp.ne.s32.totalorder %s285, %s286
      %p298 = scmp.eq.s32.totalorder %s25, 4
      %p299 = por %p297, %p298
      %p301 = scmp.ne.s32.totalorder %s286, %s300
      %p302 = scmp.eq.s32.totalorder %s25, 0
      %p303 = por %p301, %p302
      %s305 = sadd.s32 %s304, 1
      %p308 = scmp.eq.s32.totalorder %s19, 4
      %p309 = scmp.ne.s32.totalorder %s304, %s306
      %p310 = scmp.eq.s32.totalorder %s19, 0
      %p311 = por %p309, %p310
      %p312 = scmp.ne.s32.totalorder %s304, %s306
      %p313 = scmp.eq.s32.totalorder %s24, 4
      %p314 = por %p312, %p313
      %p315 = scmp.ne.s32.totalorder %s306, %s307
      %p316 = scmp.eq.s32.totalorder %s24, 0
      %p317 = por %p315, %p316
      %p318 = scmp.ne.s32.totalorder %s306, %s307
      %p319 = scmp.eq.s32.totalorder %s25, 4
      %p320 = por %p318, %p319
      %p322 = scmp.ne.s32.totalorder %s307, %s321
      %p323 = scmp.eq.s32.totalorder %s25, 0
      %p324 = por %p322, %p323
      %p325 = scmp.le.s32.totalorder 1, %s19
      %p326 = scmp.lt.s32.totalorder %s19, 6
      %p327 = pnand %p325, %p326
      %p328 = pneg %p327
      // Predicated region
      $region9: #{gnn_forward.1} parent=5 // pred_check
        _
      $region10: #{gnn_forward.1} parent=5 // pred_check_branch
        %330 = sbr.rel (%p327) target = $region12
      $region11: #{gnn_forward.1} parent=5 // pred_region
        %s331 = ssub.s32 %s19, 1
        // Predicated region
        $region13: #{gnn_forward.1} parent=11 // pred_check
          %p332 = pneg %p40
        $region14: #{gnn_forward.1} parent=11 // pred_check_branch
          %334 = sbr.rel (%p332) target = $region16
        $region15: #{gnn_forward.1} parent=11 // pred_region
          %336 = vsyncadd [#allocation4], 0
          %s338 = sshll.u32 %s0, 4
          %s339 = int_to_ptr.vmem [resolvable:$true] %s338
          %341 = dma.vmem_to_smem %s339, 16, [#allocation3], [#allocation4]
        $region16: #{gnn_forward.1} parent=11 // pred_fallthru
          _
        // Predicated region
        $region17: #{gnn_forward.1} parent=11 // pred_check
          %p342 = pneg %p61
        $region18: #{gnn_forward.1} parent=11 // pred_check_branch
          %344 = sbr.rel (%p342) target = $region20
        $region19: #{gnn_forward.1} parent=11 // pred_region
          _
        $region20: #{gnn_forward.1} parent=11 // pred_fallthru
          _
        // Predicated region
        $region21: #{gnn_forward.1} parent=11 // pred_check
          %p345 = pneg %p82
        $region22: #{gnn_forward.1} parent=11 // pred_check_branch
          %347 = sbr.rel (%p345) target = $region24
        $region23: #{gnn_forward.1} parent=11 // pred_region
          _
        $region24: #{gnn_forward.1} parent=11 // pred_fallthru
          _
        // Predicated region
        $region25: #{gnn_forward.1} parent=11 // pred_check
          %p348 = pneg %p103
        $region26: #{gnn_forward.1} parent=11 // pred_check_branch
          %350 = sbr.rel (%p348) target = $region28
        $region27: #{gnn_forward.1} parent=11 // pred_region
          _
        $region28: #{gnn_forward.1} parent=11 // pred_fallthru
          _
        // Predicated region
        $region29: #{gnn_forward.1} parent=11 // pred_check
          %p351 = pneg %p124
        $region30: #{gnn_forward.1} parent=11 // pred_check_branch
          %353 = sbr.rel (%p351) target = $region32
        $region31: #{gnn_forward.1} parent=11 // pred_region
          _
        $region32: #{gnn_forward.1} parent=11 // pred_fallthru
          _
        // Predicated region
        $region33: #{gnn_forward.1} parent=11 // pred_check
          %p354 = pneg %p275
        $region34: #{gnn_forward.1} parent=11 // pred_check_branch
          %356 = sbr.rel (%p354) target = $region36
        $region35: #{gnn_forward.1} parent=11 // pred_region
          _
        $region36: #{gnn_forward.1} parent=11 // pred_fallthru
          _
        // Predicated region
        $region37: #{gnn_forward.1} parent=11 // pred_check
          %p357 = pneg %p296
        $region38: #{gnn_forward.1} parent=11 // pred_check_branch
          %359 = sbr.rel (%p357) target = $region40
        $region39: #{gnn_forward.1} parent=11 // pred_region
          _
        $region40: #{gnn_forward.1} parent=11 // pred_fallthru
          _
      $region12: #{gnn_forward.1} parent=5 // pred_fallthru
        _
      %p360 = scmp.lt.s32.totalorder %s19, 5
      // Predicated region
      $region41: #{gnn_forward.1} parent=5 // pred_check
        %p361 = pneg %p360
      $region42: #{gnn_forward.1} parent=5 // pred_check_branch
        %363 = sbr.rel (%p361) target = $region44
      $region43: #{gnn_forward.1} parent=5 // pred_region
        // Predicated region
        $region45: #{gnn_forward.1} parent=43 // pred_check
          %p364 = pneg %p144
        $region46: #{gnn_forward.1} parent=43 // pred_check_branch
          %366 = sbr.rel (%p364) target = $region48
        $region47: #{gnn_forward.1} parent=43 // pred_region
          %p367 = scmp.lt.s32.totalorder %s19, 4
          %s368 = scalar_select %p367, %s19, 4
          %s369 = smul.addr %s368, 16
          %s370 = smul.addr %s369, 8
          %s371 = scalar_lea.vmem %s5, %s370
        $region48: #{gnn_forward.1} parent=43 // pred_fallthru
          _
        // Predicated region
        $region49: #{gnn_forward.1} parent=43 // pred_check
          %p372 = pneg %p170
        $region50: #{gnn_forward.1} parent=43 // pred_check_branch
          %374 = sbr.rel (%p372) target = $region52
        $region51: #{gnn_forward.1} parent=43 // pred_region
          %p375 = scmp.lt.s32.totalorder %s19, 4
          %s376 = scalar_select %p375, %s19, 4
          %s377 = smul.addr %s376, 32
          %s378 = smul.addr %s377, 4
          %s379 = scalar_lea.vmem %s6, %s378
        $region52: #{gnn_forward.1} parent=43 // pred_fallthru
          _
        // Predicated region
        $region53: #{gnn_forward.1} parent=43 // pred_check
          %p380 = pneg %p196
        $region54: #{gnn_forward.1} parent=43 // pred_check_branch
          %382 = sbr.rel (%p380) target = $region56
        $region55: #{gnn_forward.1} parent=43 // pred_region
          %p383 = scmp.lt.s32.totalorder %s19, 4
          %s384 = scalar_select %p383, %s19, 4
          %s385 = smul.addr %s384, 2
          %s386 = scalar_lea.vmem %s7, %s385
        $region56: #{gnn_forward.1} parent=43 // pred_fallthru
          _
        // Predicated region
        $region57: #{gnn_forward.1} parent=43 // pred_check
          %p387 = pneg %p222
        $region58: #{gnn_forward.1} parent=43 // pred_check_branch
          %389 = sbr.rel (%p387) target = $region60
        $region59: #{gnn_forward.1} parent=43 // pred_region
          %p390 = scmp.lt.s32.totalorder %s19, 4
          %s391 = scalar_select %p390, %s19, 4
          %s392 = smul.addr %s391, 32
          %s393 = smul.addr %s392, 4
          %s394 = scalar_lea.vmem %s8, %s393
        $region60: #{gnn_forward.1} parent=43 // pred_fallthru
          _
        // Predicated region
        $region61: #{gnn_forward.1} parent=43 // pred_check
          %p395 = pneg %p248
        $region62: #{gnn_forward.1} parent=43 // pred_check_branch
          %397 = sbr.rel (%p395) target = $region64
        $region63: #{gnn_forward.1} parent=43 // pred_region
          %p398 = scmp.lt.s32.totalorder %s19, 4
          %s399 = scalar_select %p398, %s19, 4
          %s400 = scalar_lea.vmem %s9, %s399
        $region64: #{gnn_forward.1} parent=43 // pred_fallthru
          _
      $region44: #{gnn_forward.1} parent=5 // pred_fallthru
        _
      %p401 = scmp.le.s32.totalorder 1, %s19
      %p402 = scmp.lt.s32.totalorder %s19, 6
      %p403 = pnand %p401, %p402
      %p404 = pneg %p403
      // Predicated region
      $region65: #{gnn_forward.1} parent=5 // pred_check
        _
      $region66: #{gnn_forward.1} parent=5 // pred_check_branch
        %406 = sbr.rel (%p403) target = $region68
      $region67: #{gnn_forward.1} parent=5 // pred_region
        %s407 = ssub.s32 %s19, 1
        // Predicated region
        $region69: #{gnn_forward.1} parent=67 // pred_check
          %p408 = pneg %p40
        $region70: #{gnn_forward.1} parent=67 // pred_check_branch
          %410 = sbr.rel (%p408) target = $region72
        $region71: #{gnn_forward.1} parent=67 // pred_region
          %412 = dma.done [#allocation4], 16
        $region72: #{gnn_forward.1} parent=67 // pred_fallthru
          _
        %413 = sfence
        %p414 = pneg %p40
        %p415 = pneg %p37
        %p416 = pneg %p61
        %p417 = pneg %p58
        %p418 = pneg %p82
        %p419 = pneg %p79
        %p420 = pneg %p103
        %p421 = pneg %p100
        %p422 = pneg %p124
        %p423 = pneg %p121
        %p424 = scmp.lt.s32.totalorder %s24, 4
        %s425 = scalar_select %p424, %s24, 4
        %s426 = smul.addr %s425, 16
        %s427 = smul.addr %s426, 8
        %s428 = scalar_lea.vmem %s5, %s427
        %p429 = pneg %p150
        %p430 = pneg %p147
        %p431 = scmp.lt.s32.totalorder %s24, 4
        %s432 = scalar_select %p431, %s24, 4
        %s433 = smul.addr %s432, 32
        %s434 = smul.addr %s433, 4
        %s435 = scalar_lea.vmem %s6, %s434
        %p436 = pneg %p176
        %p437 = pneg %p173
        %p438 = scmp.lt.s32.totalorder %s24, 4
        %s439 = scalar_select %p438, %s24, 4
        %s440 = smul.addr %s439, 2
        %s441 = scalar_lea.vmem %s7, %s440
        %p442 = pneg %p202
        %p443 = pneg %p199
        %p444 = scmp.lt.s32.totalorder %s24, 4
        %s445 = scalar_select %p444, %s24, 4
        %s446 = smul.addr %s445, 32
        %s447 = smul.addr %s446, 4
        %s448 = scalar_lea.vmem %s8, %s447
        %p449 = pneg %p228
        %p450 = pneg %p225
        %p451 = scmp.lt.s32.totalorder %s24, 4
        %s452 = scalar_select %p451, %s24, 4
        %s453 = scalar_lea.vmem %s9, %s452
        %p454 = pneg %p254
        %p455 = pneg %p251
        %p456 = pneg %p275
        %p457 = pneg %p272
        %p458 = pneg %p296
        %p459 = pneg %p293
        %p460 = pneg %p317
        %p461 = pneg %p314
        %p462 = scmp.lt.s32.totalorder %s24, 4
        %s463 = scalar_select %p462, %s24, 4
        %s464 = smul.addr %s463, 16
        %s465 = smul.addr %s464, 8
        %s466 = scalar_lea.vmem %s5, %s465
        %p467 = scmp.lt.s32.totalorder %s24, 4
        %s468 = scalar_select %p467, %s24, 4
        %s469 = smul.addr %s468, 32
        %s470 = smul.addr %s469, 4
        %s471 = scalar_lea.vmem %s6, %s470
        %p472 = scmp.lt.s32.totalorder %s24, 4
        %s473 = scalar_select %p472, %s24, 4
        %s474 = smul.addr %s473, 2
        %s475 = scalar_lea.vmem %s7, %s474
        %p476 = scmp.lt.s32.totalorder %s24, 4
        %s477 = scalar_select %p476, %s24, 4
        %s478 = smul.addr %s477, 32
        %s479 = smul.addr %s478, 4
        %s480 = scalar_lea.vmem %s8, %s479
        %p481 = scmp.lt.s32.totalorder %s24, 4
        %s482 = scalar_select %p481, %s24, 4
        %s483 = scalar_lea.vmem %s9, %s482
        %p484 = scmp.eq.s32.totalorder %s24, 0
        // Predicated region
        $region73: #{gnn_forward.1} parent=67 // pred_check
          %p485 = pneg %p484
        $region74: #{gnn_forward.1} parent=67 // pred_check_branch
          %487 = sbr.rel (%p485) target = $region76
        $region75: #{gnn_forward.1} parent=67 // pred_region
          %v488 = vld [vmem:[%s1] sm:$0xff]
          %v489 = vld [vmem:[%s1 + $0x8] sm:$0xff]
          %v490 = vld [vmem:[%s1 + $0x10] sm:$0xff]
          %v491 = vld [vmem:[%s1 + $0x18] sm:$0xff]
          %v492 = vld [vmem:[%s1 + $0x20] sm:$0xff]
          %v493 = vld [vmem:[%s1 + $0x28] sm:$0xff]
          %v494 = vld [vmem:[%s1 + $0x30] sm:$0xff]
          %v495 = vld [vmem:[%s1 + $0x38] sm:$0xff]
          %v496 = vld [vmem:[%s1 + $0x40] sm:$0xff]
          %v497 = vld [vmem:[%s1 + $0x48] sm:$0xff]
          %v498 = vld [vmem:[%s1 + $0x50] sm:$0xff]
          %v499 = vld [vmem:[%s1 + $0x58] sm:$0xff]
          %v500 = vld [vmem:[%s1 + $0x60] sm:$0xff]
          %v501 = vld [vmem:[%s1 + $0x68] sm:$0xff]
          %v502 = vld [vmem:[%s1 + $0x70] sm:$0xff]
          %v503 = vld [vmem:[%s1 + $0x78] sm:$0xff]
          %504 = vst [vmem:[#allocation2] sm:$0xff] %v488
          %505 = vst [vmem:[#allocation2 + $0x8] sm:$0xff] %v489
          %506 = vst [vmem:[#allocation2 + $0x10] sm:$0xff] %v490
          %507 = vst [vmem:[#allocation2 + $0x18] sm:$0xff] %v491
          %508 = vst [vmem:[#allocation2 + $0x20] sm:$0xff] %v492
          %509 = vst [vmem:[#allocation2 + $0x28] sm:$0xff] %v493
          %510 = vst [vmem:[#allocation2 + $0x30] sm:$0xff] %v494
          %511 = vst [vmem:[#allocation2 + $0x38] sm:$0xff] %v495
          %512 = vst [vmem:[#allocation2 + $0x40] sm:$0xff] %v496
          %513 = vst [vmem:[#allocation2 + $0x48] sm:$0xff] %v497
          %514 = vst [vmem:[#allocation2 + $0x50] sm:$0xff] %v498
          %515 = vst [vmem:[#allocation2 + $0x58] sm:$0xff] %v499
          %516 = vst [vmem:[#allocation2 + $0x60] sm:$0xff] %v500
          %517 = vst [vmem:[#allocation2 + $0x68] sm:$0xff] %v501
          %518 = vst [vmem:[#allocation2 + $0x70] sm:$0xff] %v502
          %519 = vst [vmem:[#allocation2 + $0x78] sm:$0xff] %v503
        $region76: #{gnn_forward.1} parent=67 // pred_fallthru
          _
        %v520 = vld [vmem:[#allocation2] sm:$0xff]
        %v521 = vld [vmem:[#allocation2 + $0x8] sm:$0xff]
        %v522 = vld [vmem:[#allocation2 + $0x10] sm:$0xff]
        %v523 = vld [vmem:[#allocation2 + $0x18] sm:$0xff]
        %v524 = vld [vmem:[#allocation2 + $0x20] sm:$0xff]
        %v525 = vld [vmem:[#allocation2 + $0x28] sm:$0xff]
        %v526 = vld [vmem:[#allocation2 + $0x30] sm:$0xff]
        %v527 = vld [vmem:[#allocation2 + $0x38] sm:$0xff]
        %v528 = vld [vmem:[#allocation2 + $0x40] sm:$0xff]
        %v529 = vld [vmem:[#allocation2 + $0x48] sm:$0xff]
        %v530 = vld [vmem:[#allocation2 + $0x50] sm:$0xff]
        %v531 = vld [vmem:[#allocation2 + $0x58] sm:$0xff]
        %v532 = vld [vmem:[#allocation2 + $0x60] sm:$0xff]
        %v533 = vld [vmem:[#allocation2 + $0x68] sm:$0xff]
        %v534 = vld [vmem:[#allocation2 + $0x70] sm:$0xff]
        %v535 = vld [vmem:[#allocation2 + $0x78] sm:$0xff]
        %v536 = vld [vmem:[%s2] sm:$0xff]
        %v537 = vld [vmem:[%s2 + $0x8] sm:$0xff]
        %v538 = vld [vmem:[%s2 + $0x10] sm:$0xff]
        %v539 = vld [vmem:[%s2 + $0x18] sm:$0xff]
        %v540 = vld [vmem:[%s2 + $0x20] sm:$0xff]
        %v541 = vld [vmem:[%s2 + $0x28] sm:$0xff]
        %v542 = vld [vmem:[%s2 + $0x30] sm:$0xff]
        %v543 = vld [vmem:[%s2 + $0x38] sm:$0xff]
        %v544 = vld [vmem:[%s2 + $0x40] sm:$0xff]
        %v545 = vld [vmem:[%s2 + $0x48] sm:$0xff]
        %v546 = vld [vmem:[%s2 + $0x50] sm:$0xff]
        %v547 = vld [vmem:[%s2 + $0x58] sm:$0xff]
        %v548 = vld [vmem:[%s2 + $0x60] sm:$0xff]
        %v549 = vld [vmem:[%s2 + $0x68] sm:$0xff]
        %v550 = vld [vmem:[%s2 + $0x70] sm:$0xff]
        %v551 = vld [vmem:[%s2 + $0x78] sm:$0xff]
        %v552 = vld [vmem:[%s466] sm:$0xff]
        %v553 = vld [vmem:[%s466 + $0x8] sm:$0xff]
        %v554 = vld [vmem:[%s466 + $0x10] sm:$0xff]
        %v555 = vld [vmem:[%s466 + $0x18] sm:$0xff]
        %v556 = vld [vmem:[%s466 + $0x20] sm:$0xff]
        %v557 = vld [vmem:[%s466 + $0x28] sm:$0xff]
        %v558 = vld [vmem:[%s466 + $0x30] sm:$0xff]
        %v559 = vld [vmem:[%s466 + $0x38] sm:$0xff]
        %v560 = vld [vmem:[%s466 + $0x40] sm:$0xff]
        %v561 = vld [vmem:[%s466 + $0x48] sm:$0xff]
        %v562 = vld [vmem:[%s466 + $0x50] sm:$0xff]
        %v563 = vld [vmem:[%s466 + $0x58] sm:$0xff]
        %v564 = vld [vmem:[%s466 + $0x60] sm:$0xff]
        %v565 = vld [vmem:[%s466 + $0x68] sm:$0xff]
        %v566 = vld [vmem:[%s466 + $0x70] sm:$0xff]
        %v567 = vld [vmem:[%s466 + $0x78] sm:$0xff]
        %568 = vmatpush.msra.mxu0 %v535
        %569 = vmatpush.msra.mxu0 %v534
        %570 = vmatpush.msra.mxu0 %v533
        %571 = vmatpush.msra.mxu0 %v532
        %572 = vmatpush.msra.mxu0 %v531
        %573 = vmatpush.msra.mxu0 %v530
        %574 = vmatpush.msra.mxu0 %v529
        %575 = vmatpush.msra.mxu0 %v528
        %576 = vmatpush.msra.mxu0 %v527
        %577 = vmatpush.msra.mxu0 %v526
        %578 = vmatpush.msra.mxu0 %v525
        %579 = vmatpush.msra.mxu0 %v524
        %580 = vmatpush.msra.mxu0 %v523
        %581 = vmatpush.msra.mxu0 %v522
        %582 = vmatpush.msra.mxu0 %v521
        %583 = vmatpush.msra.mxu0 %v520
        %584 = vmatmul.f32.gmra.mxu0 %v536
        %v585 = vpop.f32.mrf.mxu0
        %v586 = vadd.f32 %v552, %v585
        %587 = vmatmul.f32.gmra.mxu0 %v537
        %v588 = vpop.f32.mrf.mxu0
        %v589 = vadd.f32 %v553, %v588
        %590 = vmatmul.f32.gmra.mxu0 %v538
        %v591 = vpop.f32.mrf.mxu0
        %v592 = vadd.f32 %v554, %v591
        %593 = vmatmul.f32.gmra.mxu0 %v539
        %v594 = vpop.f32.mrf.mxu0
        %v595 = vadd.f32 %v555, %v594
        %596 = vmatmul.f32.gmra.mxu0 %v540
        %v597 = vpop.f32.mrf.mxu0
        %v598 = vadd.f32 %v556, %v597
        %599 = vmatmul.f32.gmra.mxu0 %v541
        %v600 = vpop.f32.mrf.mxu0
        %v601 = vadd.f32 %v557, %v600
        %602 = vmatmul.f32.gmra.mxu0 %v542
        %v603 = vpop.f32.mrf.mxu0
        %v604 = vadd.f32 %v558, %v603
        %605 = vmatmul.f32.gmra.mxu0 %v543
        %v606 = vpop.f32.mrf.mxu0
        %v607 = vadd.f32 %v559, %v606
        %608 = vmatmul.f32.gmra.mxu0 %v544
        %v609 = vpop.f32.mrf.mxu0
        %v610 = vadd.f32 %v560, %v609
        %611 = vmatmul.f32.gmra.mxu0 %v545
        %v612 = vpop.f32.mrf.mxu0
        %v613 = vadd.f32 %v561, %v612
        %614 = vmatmul.f32.gmra.mxu0 %v546
        %v615 = vpop.f32.mrf.mxu0
        %v616 = vadd.f32 %v562, %v615
        %617 = vmatmul.f32.gmra.mxu0 %v547
        %v618 = vpop.f32.mrf.mxu0
        %v619 = vadd.f32 %v563, %v618
        %620 = vmatmul.f32.gmra.mxu0 %v548
        %v621 = vpop.f32.mrf.mxu0
        %v622 = vadd.f32 %v564, %v621
        %623 = vmatmul.f32.gmra.mxu0 %v549
        %v624 = vpop.f32.mrf.mxu0
        %v625 = vadd.f32 %v565, %v624
        %626 = vmatmul.f32.gmra.mxu0 %v550
        %v627 = vpop.f32.mrf.mxu0
        %v628 = vadd.f32 %v566, %v627
        %629 = vmatmul.f32.gmra.mxu0 %v551
        %v630 = vpop.f32.mrf.mxu0
        %v631 = vadd.f32 %v567, %v630
        %632 = vdwg.mxu0
        %v633 = vmax.f32 %v586, 0.0
        %v634 = vmax.f32 %v589, 0.0
        %v635 = vmax.f32 %v592, 0.0
        %v636 = vmax.f32 %v595, 0.0
        %v637 = vmax.f32 %v598, 0.0
        %v638 = vmax.f32 %v601, 0.0
        %v639 = vmax.f32 %v604, 0.0
        %v640 = vmax.f32 %v607, 0.0
        %v641 = vmax.f32 %v610, 0.0
        %v642 = vmax.f32 %v613, 0.0
        %v643 = vmax.f32 %v616, 0.0
        %v644 = vmax.f32 %v619, 0.0
        %v645 = vmax.f32 %v622, 0.0
        %v646 = vmax.f32 %v625, 0.0
        %v647 = vmax.f32 %v628, 0.0
        %v648 = vmax.f32 %v631, 0.0
        %v649 = vld [vmem:[%s3] sm:$0xff]
        %v650 = vld [vmem:[%s3 + $0x8] sm:$0xff]
        %v651 = vld [vmem:[%s3 + $0x10] sm:$0xff]
        %v652 = vld [vmem:[%s3 + $0x18] sm:$0xff]
        %v653 = vld [vmem:[%s3 + $0x20] sm:$0xff]
        %v654 = vld [vmem:[%s3 + $0x28] sm:$0xff]
        %v655 = vld [vmem:[%s3 + $0x30] sm:$0xff]
        %v656 = vld [vmem:[%s3 + $0x38] sm:$0xff]
        %v657 = vld [vmem:[%s3 + $0x40] sm:$0xff]
        %v658 = vld [vmem:[%s3 + $0x48] sm:$0xff]
        %v659 = vld [vmem:[%s3 + $0x50] sm:$0xff]
        %v660 = vld [vmem:[%s3 + $0x58] sm:$0xff]
        %v661 = vld [vmem:[%s3 + $0x60] sm:$0xff]
        %v662 = vld [vmem:[%s3 + $0x68] sm:$0xff]
        %v663 = vld [vmem:[%s3 + $0x70] sm:$0xff]
        %v664 = vld [vmem:[%s3 + $0x78] sm:$0xff]
        %665 = vmatpush.msra.mxu0 %v648
        %666 = vmatpush.msra.mxu0 %v647
        %667 = vmatpush.msra.mxu0 %v646
        %668 = vmatpush.msra.mxu0 %v645
        %669 = vmatpush.msra.mxu0 %v644
        %670 = vmatpush.msra.mxu0 %v643
        %671 = vmatpush.msra.mxu0 %v642
        %672 = vmatpush.msra.mxu0 %v641
        %673 = vmatpush.msra.mxu0 %v640
        %674 = vmatpush.msra.mxu0 %v639
        %675 = vmatpush.msra.mxu0 %v638
        %676 = vmatpush.msra.mxu0 %v637
        %677 = vmatpush.msra.mxu0 %v636
        %678 = vmatpush.msra.mxu0 %v635
        %679 = vmatpush.msra.mxu0 %v634
        %680 = vmatpush.msra.mxu0 %v633
        %681 = vmatmul.f32.gmra.mxu0 %v649
        %v682 = vpop.f32.mrf.mxu0
        %v683 = vadd.f32 0.0, %v682
        %684 = vmatmul.f32.gmra.mxu0 %v650
        %v685 = vpop.f32.mrf.mxu0
        %v686 = vadd.f32 0.0, %v685
        %687 = vmatmul.f32.gmra.mxu0 %v651
        %v688 = vpop.f32.mrf.mxu0
        %v689 = vadd.f32 0.0, %v688
        %690 = vmatmul.f32.gmra.mxu0 %v652
        %v691 = vpop.f32.mrf.mxu0
        %v692 = vadd.f32 0.0, %v691
        %693 = vmatmul.f32.gmra.mxu0 %v653
        %v694 = vpop.f32.mrf.mxu0
        %v695 = vadd.f32 0.0, %v694
        %696 = vmatmul.f32.gmra.mxu0 %v654
        %v697 = vpop.f32.mrf.mxu0
        %v698 = vadd.f32 0.0, %v697
        %699 = vmatmul.f32.gmra.mxu0 %v655
        %v700 = vpop.f32.mrf.mxu0
        %v701 = vadd.f32 0.0, %v700
        %702 = vmatmul.f32.gmra.mxu0 %v656
        %v703 = vpop.f32.mrf.mxu0
        %v704 = vadd.f32 0.0, %v703
        %705 = vmatmul.f32.gmra.mxu0 %v657
        %v706 = vpop.f32.mrf.mxu0
        %v707 = vadd.f32 0.0, %v706
        %708 = vmatmul.f32.gmra.mxu0 %v658
        %v709 = vpop.f32.mrf.mxu0
        %v710 = vadd.f32 0.0, %v709
        %711 = vmatmul.f32.gmra.mxu0 %v659
        %v712 = vpop.f32.mrf.mxu0
        %v713 = vadd.f32 0.0, %v712
        %714 = vmatmul.f32.gmra.mxu0 %v660
        %v715 = vpop.f32.mrf.mxu0
        %v716 = vadd.f32 0.0, %v715
        %717 = vmatmul.f32.gmra.mxu0 %v661
        %v718 = vpop.f32.mrf.mxu0
        %v719 = vadd.f32 0.0, %v718
        %720 = vmatmul.f32.gmra.mxu0 %v662
        %v721 = vpop.f32.mrf.mxu0
        %v722 = vadd.f32 0.0, %v721
        %723 = vmatmul.f32.gmra.mxu0 %v663
        %v724 = vpop.f32.mrf.mxu0
        %v725 = vadd.f32 0.0, %v724
        %726 = vmatmul.f32.gmra.mxu0 %v664
        %v727 = vpop.f32.mrf.mxu0
        %v728 = vadd.f32 0.0, %v727
        %729 = vdwg.mxu0
        %s730 = sld [smem:[#allocation3 + %s24]]
        %v731 = vstv %s730
        %v732 = vmul.f32 %v731, %v520
        %v733 = vmul.f32 %v731, %v521
        %v734 = vmul.f32 %v731, %v522
        %v735 = vmul.f32 %v731, %v523
        %v736 = vmul.f32 %v731, %v524
        %v737 = vmul.f32 %v731, %v525
        %v738 = vmul.f32 %v731, %v526
        %v739 = vmul.f32 %v731, %v527
        %v740 = vmul.f32 %v731, %v528
        %v741 = vmul.f32 %v731, %v529
        %v742 = vmul.f32 %v731, %v530
        %v743 = vmul.f32 %v731, %v531
        %v744 = vmul.f32 %v731, %v532
        %v745 = vmul.f32 %v731, %v533
        %v746 = vmul.f32 %v731, %v534
        %v747 = vmul.f32 %v731, %v535
        %v748 = vadd.f32 %v732, %v683
        %v749 = vadd.f32 %v733, %v686
        %v750 = vadd.f32 %v734, %v689
        %v751 = vadd.f32 %v735, %v692
        %v752 = vadd.f32 %v736, %v695
        %v753 = vadd.f32 %v737, %v698
        %v754 = vadd.f32 %v738, %v701
        %v755 = vadd.f32 %v739, %v704
        %v756 = vadd.f32 %v740, %v707
        %v757 = vadd.f32 %v741, %v710
        %v758 = vadd.f32 %v742, %v713
        %v759 = vadd.f32 %v743, %v716
        %v760 = vadd.f32 %v744, %v719
        %v761 = vadd.f32 %v745, %v722
        %v762 = vadd.f32 %v746, %v725
        %v763 = vadd.f32 %v747, %v728
        %v764 = vpack.c.bf16 %v749, %v748
        %v765 = vpack.c.bf16 %v751, %v750
        %v766 = vpack.c.bf16 %v753, %v752
        %v767 = vpack.c.bf16 %v755, %v754
        %v768 = vpack.c.bf16 %v757, %v756
        %v769 = vpack.c.bf16 %v759, %v758
        %v770 = vpack.c.bf16 %v761, %v760
        %v771 = vpack.c.bf16 %v763, %v762
        %v772 = vld [vmem:[%s471] sm:$0xff]
        %v773 = vld [vmem:[%s471 + $0x8] sm:$0xff]
        %v774 = vld [vmem:[%s471 + $0x10] sm:$0xff]
        %v775 = vld [vmem:[%s471 + $0x18] sm:$0xff]
        %v776 = vld [vmem:[%s471 + $0x20] sm:$0xff]
        %v777 = vld [vmem:[%s471 + $0x28] sm:$0xff]
        %v778 = vld [vmem:[%s471 + $0x30] sm:$0xff]
        %v779 = vld [vmem:[%s471 + $0x38] sm:$0xff]
        %v780 = vld [vmem:[%s471 + $0x40] sm:$0xff]
        %v781 = vld [vmem:[%s471 + $0x48] sm:$0xff]
        %v782 = vld [vmem:[%s471 + $0x50] sm:$0xff]
        %v783 = vld [vmem:[%s471 + $0x58] sm:$0xff]
        %v784 = vld [vmem:[%s471 + $0x60] sm:$0xff]
        %v785 = vld [vmem:[%s471 + $0x68] sm:$0xff]
        %v786 = vld [vmem:[%s471 + $0x70] sm:$0xff]
        %v787 = vld [vmem:[%s471 + $0x78] sm:$0xff]
        %v788 = vld [vmem:[%s475] sm:$0x3]
        %v790 = vperm.slane %v788, 0
        %v791 = vperm.slane %v788, 1
        %v810 = vunpack.c.l.b16 %v772
        %v811 = vunpack.c.h.b16 %v772
        %v812 = vunpack.c.l.b16 %v773
        %v813 = vunpack.c.h.b16 %v773
        %v814 = vunpack.c.l.b16 %v774
        %v815 = vunpack.c.h.b16 %v774
        %v816 = vunpack.c.l.b16 %v775
        %v817 = vunpack.c.h.b16 %v775
        %v818 = vunpack.c.l.b16 %v776
        %v819 = vunpack.c.h.b16 %v776
        %v820 = vunpack.c.l.b16 %v777
        %v821 = vunpack.c.h.b16 %v777
        %v822 = vunpack.c.l.b16 %v778
        %v823 = vunpack.c.h.b16 %v778
        %v824 = vunpack.c.l.b16 %v779
        %v825 = vunpack.c.h.b16 %v779
        %v826 = vunpack.c.l.b16 %v780
        %v827 = vunpack.c.h.b16 %v780
        %v828 = vunpack.c.l.b16 %v781
        %v829 = vunpack.c.h.b16 %v781
        %v830 = vunpack.c.l.b16 %v782
        %v831 = vunpack.c.h.b16 %v782
        %v832 = vunpack.c.l.b16 %v783
        %v833 = vunpack.c.h.b16 %v783
        %v834 = vunpack.c.l.b16 %v784
        %v835 = vunpack.c.h.b16 %v784
        %v836 = vunpack.c.l.b16 %v785
        %v837 = vunpack.c.h.b16 %v785
        %v838 = vunpack.c.l.b16 %v786
        %v839 = vunpack.c.h.b16 %v786
        %v840 = vunpack.c.l.b16 %v787
        %v841 = vunpack.c.h.b16 %v787
        %v842 = vpack.c.b16 %v812, %v810
        %v843 = vpack.c.b16 %v813, %v811
        %v844 = vpack.c.b16 %v816, %v814
        %v845 = vpack.c.b16 %v817, %v815
        %v846 = vpack.c.b16 %v820, %v818
        %v847 = vpack.c.b16 %v821, %v819
        %v848 = vpack.c.b16 %v824, %v822
        %v849 = vpack.c.b16 %v825, %v823
        %v850 = vpack.c.b16 %v828, %v826
        %v851 = vpack.c.b16 %v829, %v827
        %v852 = vpack.c.b16 %v832, %v830
        %v853 = vpack.c.b16 %v833, %v831
        %v854 = vpack.c.b16 %v836, %v834
        %v855 = vpack.c.b16 %v837, %v835
        %v856 = vpack.c.b16 %v840, %v838
        %v857 = vpack.c.b16 %v841, %v839
        %874 = vmatpush.bf16.msra.mxu0 %v856
        %875 = vmatpush.bf16.msra.mxu0 %v854
        %876 = vmatpush.bf16.msra.mxu0 %v852
        %877 = vmatpush.bf16.msra.mxu0 %v850
        %878 = vmatpush.bf16.msra.mxu0 %v848
        %879 = vmatpush.bf16.msra.mxu0 %v846
        %880 = vmatpush.bf16.msra.mxu0 %v844
        %881 = vmatpush.bf16.msra.mxu0 %v842
        %882 = vmatmul.bf16.gmra.mxu0 %v764
        %v883 = vpop.f32.mrf.mxu0
        %v884 = vadd.f32 %v790, %v883
        %v885 = vpop.f32.mrf.mxu0
        %v886 = vadd.f32 %v790, %v885
        %887 = vmatmul.bf16.gmra.mxu0 %v765
        %v888 = vpop.f32.mrf.mxu0
        %v889 = vadd.f32 %v790, %v888
        %v890 = vpop.f32.mrf.mxu0
        %v891 = vadd.f32 %v790, %v890
        %892 = vmatmul.bf16.gmra.mxu0 %v766
        %v893 = vpop.f32.mrf.mxu0
        %v894 = vadd.f32 %v790, %v893
        %v895 = vpop.f32.mrf.mxu0
        %v896 = vadd.f32 %v790, %v895
        %897 = vmatmul.bf16.gmra.mxu0 %v767
        %v898 = vpop.f32.mrf.mxu0
        %v899 = vadd.f32 %v790, %v898
        %v900 = vpop.f32.mrf.mxu0
        %v901 = vadd.f32 %v790, %v900
        %902 = vmatmul.bf16.gmra.mxu0 %v768
        %v903 = vpop.f32.mrf.mxu0
        %v904 = vadd.f32 %v790, %v903
        %v905 = vpop.f32.mrf.mxu0
        %v906 = vadd.f32 %v790, %v905
        %907 = vmatmul.bf16.gmra.mxu0 %v769
        %v908 = vpop.f32.mrf.mxu0
        %v909 = vadd.f32 %v790, %v908
        %v910 = vpop.f32.mrf.mxu0
        %v911 = vadd.f32 %v790, %v910
        %912 = vmatmul.bf16.gmra.mxu0 %v770
        %v913 = vpop.f32.mrf.mxu0
        %v914 = vadd.f32 %v790, %v913
        %v915 = vpop.f32.mrf.mxu0
        %v916 = vadd.f32 %v790, %v915
        %917 = vmatmul.bf16.gmra.mxu0 %v771
        %v918 = vpop.f32.mrf.mxu0
        %v919 = vadd.f32 %v790, %v918
        %v920 = vpop.f32.mrf.mxu0
        %v921 = vadd.f32 %v790, %v920
        %922 = vdwg.mxu0
        %923 = vmatpush.bf16.msra.mxu0 %v857
        %924 = vmatpush.bf16.msra.mxu0 %v855
        %925 = vmatpush.bf16.msra.mxu0 %v853
        %926 = vmatpush.bf16.msra.mxu0 %v851
        %927 = vmatpush.bf16.msra.mxu0 %v849
        %928 = vmatpush.bf16.msra.mxu0 %v847
        %929 = vmatpush.bf16.msra.mxu0 %v845
        %930 = vmatpush.bf16.msra.mxu0 %v843
        %931 = vmatmul.bf16.gmra.mxu0 %v764
        %v932 = vpop.f32.mrf.mxu0
        %v933 = vadd.f32 %v791, %v932
        %v934 = vpop.f32.mrf.mxu0
        %v935 = vadd.f32 %v791, %v934
        %936 = vmatmul.bf16.gmra.mxu0 %v765
        %v937 = vpop.f32.mrf.mxu0
        %v938 = vadd.f32 %v791, %v937
        %v939 = vpop.f32.mrf.mxu0
        %v940 = vadd.f32 %v791, %v939
        %941 = vmatmul.bf16.gmra.mxu0 %v766
        %v942 = vpop.f32.mrf.mxu0
        %v943 = vadd.f32 %v791, %v942
        %v944 = vpop.f32.mrf.mxu0
        %v945 = vadd.f32 %v791, %v944
        %946 = vmatmul.bf16.gmra.mxu0 %v767
        %v947 = vpop.f32.mrf.mxu0
        %v948 = vadd.f32 %v791, %v947
        %v949 = vpop.f32.mrf.mxu0
        %v950 = vadd.f32 %v791, %v949
        %951 = vmatmul.bf16.gmra.mxu0 %v768
        %v952 = vpop.f32.mrf.mxu0
        %v953 = vadd.f32 %v791, %v952
        %v954 = vpop.f32.mrf.mxu0
        %v955 = vadd.f32 %v791, %v954
        %956 = vmatmul.bf16.gmra.mxu0 %v769
        %v957 = vpop.f32.mrf.mxu0
        %v958 = vadd.f32 %v791, %v957
        %v959 = vpop.f32.mrf.mxu0
        %v960 = vadd.f32 %v791, %v959
        %961 = vmatmul.bf16.gmra.mxu0 %v770
        %v962 = vpop.f32.mrf.mxu0
        %v963 = vadd.f32 %v791, %v962
        %v964 = vpop.f32.mrf.mxu0
        %v965 = vadd.f32 %v791, %v964
        %966 = vmatmul.bf16.gmra.mxu0 %v771
        %v967 = vpop.f32.mrf.mxu0
        %v968 = vadd.f32 %v791, %v967
        %v969 = vpop.f32.mrf.mxu0
        %v970 = vadd.f32 %v791, %v969
        %971 = vdwg.mxu0
        %v972 = vmax.f32 %v884, 0.0
        %v973 = vmax.f32 %v933, 0.0
        %v974 = vmax.f32 %v886, 0.0
        %v975 = vmax.f32 %v935, 0.0
        %v976 = vmax.f32 %v889, 0.0
        %v977 = vmax.f32 %v938, 0.0
        %v978 = vmax.f32 %v891, 0.0
        %v979 = vmax.f32 %v940, 0.0
        %v980 = vmax.f32 %v894, 0.0
        %v981 = vmax.f32 %v943, 0.0
        %v982 = vmax.f32 %v896, 0.0
        %v983 = vmax.f32 %v945, 0.0
        %v984 = vmax.f32 %v899, 0.0
        %v985 = vmax.f32 %v948, 0.0
        %v986 = vmax.f32 %v901, 0.0
        %v987 = vmax.f32 %v950, 0.0
        %v988 = vmax.f32 %v904, 0.0
        %v989 = vmax.f32 %v953, 0.0
        %v990 = vmax.f32 %v906, 0.0
        %v991 = vmax.f32 %v955, 0.0
        %v992 = vmax.f32 %v909, 0.0
        %v993 = vmax.f32 %v958, 0.0
        %v994 = vmax.f32 %v911, 0.0
        %v995 = vmax.f32 %v960, 0.0
        %v996 = vmax.f32 %v914, 0.0
        %v997 = vmax.f32 %v963, 0.0
        %v998 = vmax.f32 %v916, 0.0
        %v999 = vmax.f32 %v965, 0.0
        %v1000 = vmax.f32 %v919, 0.0
        %v1001 = vmax.f32 %v968, 0.0
        %v1002 = vmax.f32 %v921, 0.0
        %v1003 = vmax.f32 %v970, 0.0
        %v1004 = vpack.c.bf16 %v974, %v972
        %v1005 = vpack.c.bf16 %v975, %v973
        %v1006 = vpack.c.bf16 %v978, %v976
        %v1007 = vpack.c.bf16 %v979, %v977
        %v1008 = vpack.c.bf16 %v982, %v980
        %v1009 = vpack.c.bf16 %v983, %v981
        %v1010 = vpack.c.bf16 %v986, %v984
        %v1011 = vpack.c.bf16 %v987, %v985
        %v1012 = vpack.c.bf16 %v990, %v988
        %v1013 = vpack.c.bf16 %v991, %v989
        %v1014 = vpack.c.bf16 %v994, %v992
        %v1015 = vpack.c.bf16 %v995, %v993
        %v1016 = vpack.c.bf16 %v998, %v996
        %v1017 = vpack.c.bf16 %v999, %v997
        %v1018 = vpack.c.bf16 %v1002, %v1000
        %v1019 = vpack.c.bf16 %v1003, %v1001
        %v1020 = vld [vmem:[%s480] sm:$0xf]
        %v1021 = vld [vmem:[%s480 + $0x4] sm:$0xf]
        %v1022 = vld [vmem:[%s480 + $0x8] sm:$0xf]
        %v1023 = vld [vmem:[%s480 + $0xc] sm:$0xf]
        %v1024 = vld [vmem:[%s480 + $0x10] sm:$0xf]
        %v1025 = vld [vmem:[%s480 + $0x14] sm:$0xf]
        %v1026 = vld [vmem:[%s480 + $0x18] sm:$0xf]
        %v1027 = vld [vmem:[%s480 + $0x1c] sm:$0xf]
        %v1028 = vld [vmem:[%s480 + $0x20] sm:$0xf]
        %v1029 = vld [vmem:[%s480 + $0x24] sm:$0xf]
        %v1030 = vld [vmem:[%s480 + $0x28] sm:$0xf]
        %v1031 = vld [vmem:[%s480 + $0x2c] sm:$0xf]
        %v1032 = vld [vmem:[%s480 + $0x30] sm:$0xf]
        %v1033 = vld [vmem:[%s480 + $0x34] sm:$0xf]
        %v1034 = vld [vmem:[%s480 + $0x38] sm:$0xf]
        %v1035 = vld [vmem:[%s480 + $0x3c] sm:$0xf]
        %v1036 = vld [vmem:[%s480 + $0x40] sm:$0xf]
        %v1037 = vld [vmem:[%s480 + $0x44] sm:$0xf]
        %v1038 = vld [vmem:[%s480 + $0x48] sm:$0xf]
        %v1039 = vld [vmem:[%s480 + $0x4c] sm:$0xf]
        %v1040 = vld [vmem:[%s480 + $0x50] sm:$0xf]
        %v1041 = vld [vmem:[%s480 + $0x54] sm:$0xf]
        %v1042 = vld [vmem:[%s480 + $0x58] sm:$0xf]
        %v1043 = vld [vmem:[%s480 + $0x5c] sm:$0xf]
        %v1044 = vld [vmem:[%s480 + $0x60] sm:$0xf]
        %v1045 = vld [vmem:[%s480 + $0x64] sm:$0xf]
        %v1046 = vld [vmem:[%s480 + $0x68] sm:$0xf]
        %v1047 = vld [vmem:[%s480 + $0x6c] sm:$0xf]
        %v1048 = vld [vmem:[%s480 + $0x70] sm:$0xf]
        %v1049 = vld [vmem:[%s480 + $0x74] sm:$0xf]
        %v1050 = vld [vmem:[%s480 + $0x78] sm:$0xf]
        %v1051 = vld [vmem:[%s480 + $0x7c] sm:$0xf]
        %v1052 = vld [vmem:[%s483] sm:$0x1]
        %v1054 = vperm.slane %v1052, 0
        %v1088 = vunpack.c.l.b16 %v1020
        %v1089 = vunpack.c.l.b16 %v1021
        %v1090 = vunpack.c.l.b16 %v1022
        %v1091 = vunpack.c.l.b16 %v1023
        %v1092 = vunpack.c.l.b16 %v1024
        %v1093 = vunpack.c.l.b16 %v1025
        %v1094 = vunpack.c.l.b16 %v1026
        %v1095 = vunpack.c.l.b16 %v1027
        %v1096 = vunpack.c.l.b16 %v1028
        %v1097 = vunpack.c.l.b16 %v1029
        %v1098 = vunpack.c.l.b16 %v1030
        %v1099 = vunpack.c.l.b16 %v1031
        %v1100 = vunpack.c.l.b16 %v1032
        %v1101 = vunpack.c.l.b16 %v1033
        %v1102 = vunpack.c.l.b16 %v1034
        %v1103 = vunpack.c.l.b16 %v1035
        %v1104 = vunpack.c.l.b16 %v1036
        %v1105 = vunpack.c.l.b16 %v1037
        %v1106 = vunpack.c.l.b16 %v1038
        %v1107 = vunpack.c.l.b16 %v1039
        %v1108 = vunpack.c.l.b16 %v1040
        %v1109 = vunpack.c.l.b16 %v1041
        %v1110 = vunpack.c.l.b16 %v1042
        %v1111 = vunpack.c.l.b16 %v1043
        %v1112 = vunpack.c.l.b16 %v1044
        %v1113 = vunpack.c.l.b16 %v1045
        %v1114 = vunpack.c.l.b16 %v1046
        %v1115 = vunpack.c.l.b16 %v1047
        %v1116 = vunpack.c.l.b16 %v1048
        %v1117 = vunpack.c.l.b16 %v1049
        %v1118 = vunpack.c.l.b16 %v1050
        %v1119 = vunpack.c.l.b16 %v1051
        %v1120 = vpack.c.b16 %v1089, %v1088
        %v1121 = vpack.c.b16 %v1091, %v1090
        %v1122 = vpack.c.b16 %v1093, %v1092
        %v1123 = vpack.c.b16 %v1095, %v1094
        %v1124 = vpack.c.b16 %v1097, %v1096
        %v1125 = vpack.c.b16 %v1099, %v1098
        %v1126 = vpack.c.b16 %v1101, %v1100
        %v1127 = vpack.c.b16 %v1103, %v1102
        %v1128 = vpack.c.b16 %v1105, %v1104
        %v1129 = vpack.c.b16 %v1107, %v1106
        %v1130 = vpack.c.b16 %v1109, %v1108
        %v1131 = vpack.c.b16 %v1111, %v1110
        %v1132 = vpack.c.b16 %v1113, %v1112
        %v1133 = vpack.c.b16 %v1115, %v1114
        %v1134 = vpack.c.b16 %v1117, %v1116
        %v1135 = vpack.c.b16 %v1119, %v1118
        %1152 = vmatpush.bf16.msra.mxu0 %v1127
        %1153 = vmatpush.bf16.msra.mxu0 %v1126
        %1154 = vmatpush.bf16.msra.mxu0 %v1125
        %1155 = vmatpush.bf16.msra.mxu0 %v1124
        %1156 = vmatpush.bf16.msra.mxu0 %v1123
        %1157 = vmatpush.bf16.msra.mxu0 %v1122
        %1158 = vmatpush.bf16.msra.mxu0 %v1121
        %1159 = vmatpush.bf16.msra.mxu0 %v1120
        %1160 = vmatmul.bf16.gmra.mxu0 %v1004
        %v1161 = vpop.f32.mrf.mxu0
        %v1162 = vadd.f32 %v1054, %v1161
        %v1163 = vpop.f32.mrf.mxu0
        %v1164 = vadd.f32 %v1054, %v1163
        %1165 = vmatmul.bf16.gmra.mxu0 %v1006
        %v1166 = vpop.f32.mrf.mxu0
        %v1167 = vadd.f32 %v1054, %v1166
        %v1168 = vpop.f32.mrf.mxu0
        %v1169 = vadd.f32 %v1054, %v1168
        %1170 = vmatmul.bf16.gmra.mxu0 %v1008
        %v1171 = vpop.f32.mrf.mxu0
        %v1172 = vadd.f32 %v1054, %v1171
        %v1173 = vpop.f32.mrf.mxu0
        %v1174 = vadd.f32 %v1054, %v1173
        %1175 = vmatmul.bf16.gmra.mxu0 %v1010
        %v1176 = vpop.f32.mrf.mxu0
        %v1177 = vadd.f32 %v1054, %v1176
        %v1178 = vpop.f32.mrf.mxu0
        %v1179 = vadd.f32 %v1054, %v1178
        %1180 = vmatmul.bf16.gmra.mxu0 %v1012
        %v1181 = vpop.f32.mrf.mxu0
        %v1182 = vadd.f32 %v1054, %v1181
        %v1183 = vpop.f32.mrf.mxu0
        %v1184 = vadd.f32 %v1054, %v1183
        %1185 = vmatmul.bf16.gmra.mxu0 %v1014
        %v1186 = vpop.f32.mrf.mxu0
        %v1187 = vadd.f32 %v1054, %v1186
        %v1188 = vpop.f32.mrf.mxu0
        %v1189 = vadd.f32 %v1054, %v1188
        %1190 = vmatmul.bf16.gmra.mxu0 %v1016
        %v1191 = vpop.f32.mrf.mxu0
        %v1192 = vadd.f32 %v1054, %v1191
        %v1193 = vpop.f32.mrf.mxu0
        %v1194 = vadd.f32 %v1054, %v1193
        %1195 = vmatmul.bf16.gmra.mxu0 %v1018
        %v1196 = vpop.f32.mrf.mxu0
        %v1197 = vadd.f32 %v1054, %v1196
        %v1198 = vpop.f32.mrf.mxu0
        %v1199 = vadd.f32 %v1054, %v1198
        %1200 = vdwg.mxu0
        %1201 = vmatpush.bf16.msra.mxu0 %v1135
        %1202 = vmatpush.bf16.msra.mxu0 %v1134
        %1203 = vmatpush.bf16.msra.mxu0 %v1133
        %1204 = vmatpush.bf16.msra.mxu0 %v1132
        %1205 = vmatpush.bf16.msra.mxu0 %v1131
        %1206 = vmatpush.bf16.msra.mxu0 %v1130
        %1207 = vmatpush.bf16.msra.mxu0 %v1129
        %1208 = vmatpush.bf16.msra.mxu0 %v1128
        %1209 = vmatmul.bf16.gmra.mxu0 %v1005
        %v1210 = vpop.f32.mrf.mxu0
        %v1211 = vadd.f32 %v1162, %v1210
        %v1212 = vpop.f32.mrf.mxu0
        %v1213 = vadd.f32 %v1164, %v1212
        %1214 = vmatmul.bf16.gmra.mxu0 %v1007
        %v1215 = vpop.f32.mrf.mxu0
        %v1216 = vadd.f32 %v1167, %v1215
        %v1217 = vpop.f32.mrf.mxu0
        %v1218 = vadd.f32 %v1169, %v1217
        %1219 = vmatmul.bf16.gmra.mxu0 %v1009
        %v1220 = vpop.f32.mrf.mxu0
        %v1221 = vadd.f32 %v1172, %v1220
        %v1222 = vpop.f32.mrf.mxu0
        %v1223 = vadd.f32 %v1174, %v1222
        %1224 = vmatmul.bf16.gmra.mxu0 %v1011
        %v1225 = vpop.f32.mrf.mxu0
        %v1226 = vadd.f32 %v1177, %v1225
        %v1227 = vpop.f32.mrf.mxu0
        %v1228 = vadd.f32 %v1179, %v1227
        %1229 = vmatmul.bf16.gmra.mxu0 %v1013
        %v1230 = vpop.f32.mrf.mxu0
        %v1231 = vadd.f32 %v1182, %v1230
        %v1232 = vpop.f32.mrf.mxu0
        %v1233 = vadd.f32 %v1184, %v1232
        %1234 = vmatmul.bf16.gmra.mxu0 %v1015
        %v1235 = vpop.f32.mrf.mxu0
        %v1236 = vadd.f32 %v1187, %v1235
        %v1237 = vpop.f32.mrf.mxu0
        %v1238 = vadd.f32 %v1189, %v1237
        %1239 = vmatmul.bf16.gmra.mxu0 %v1017
        %v1240 = vpop.f32.mrf.mxu0
        %v1241 = vadd.f32 %v1192, %v1240
        %v1242 = vpop.f32.mrf.mxu0
        %v1243 = vadd.f32 %v1194, %v1242
        %1244 = vmatmul.bf16.gmra.mxu0 %v1019
        %v1245 = vpop.f32.mrf.mxu0
        %v1246 = vadd.f32 %v1197, %v1245
        %v1247 = vpop.f32.mrf.mxu0
        %v1248 = vadd.f32 %v1199, %v1247
        %1249 = vdwg.mxu0
        %p1250 = scmp.lt.s32.totalorder %s24, 4
        // Predicated region
        $region77: #{gnn_forward.1} parent=67 // pred_check
          %p1251 = pneg %p1250
        $region78: #{gnn_forward.1} parent=67 // pred_check_branch
          %1253 = sbr.rel (%p1251) target = $region80
        $region79: #{gnn_forward.1} parent=67 // pred_region
          %v1254 = vmax.f32 %v1211, 0.0
          %v1255 = vmax.f32 %v1213, 0.0
          %v1256 = vmax.f32 %v1216, 0.0
          %v1257 = vmax.f32 %v1218, 0.0
          %v1258 = vmax.f32 %v1221, 0.0
          %v1259 = vmax.f32 %v1223, 0.0
          %v1260 = vmax.f32 %v1226, 0.0
          %v1261 = vmax.f32 %v1228, 0.0
          %v1262 = vmax.f32 %v1231, 0.0
          %v1263 = vmax.f32 %v1233, 0.0
          %v1264 = vmax.f32 %v1236, 0.0
          %v1265 = vmax.f32 %v1238, 0.0
          %v1266 = vmax.f32 %v1241, 0.0
          %v1267 = vmax.f32 %v1243, 0.0
          %v1268 = vmax.f32 %v1246, 0.0
          %v1269 = vmax.f32 %v1248, 0.0
          %1270 = vst [vmem:[#allocation2] sm:$0xff] %v1254
          %1271 = vst [vmem:[#allocation2 + $0x8] sm:$0xff] %v1255
          %1272 = vst [vmem:[#allocation2 + $0x10] sm:$0xff] %v1256
          %1273 = vst [vmem:[#allocation2 + $0x18] sm:$0xff] %v1257
          %1274 = vst [vmem:[#allocation2 + $0x20] sm:$0xff] %v1258
          %1275 = vst [vmem:[#allocation2 + $0x28] sm:$0xff] %v1259
          %1276 = vst [vmem:[#allocation2 + $0x30] sm:$0xff] %v1260
          %1277 = vst [vmem:[#allocation2 + $0x38] sm:$0xff] %v1261
          %1278 = vst [vmem:[#allocation2 + $0x40] sm:$0xff] %v1262
          %1279 = vst [vmem:[#allocation2 + $0x48] sm:$0xff] %v1263
          %1280 = vst [vmem:[#allocation2 + $0x50] sm:$0xff] %v1264
          %1281 = vst [vmem:[#allocation2 + $0x58] sm:$0xff] %v1265
          %1282 = vst [vmem:[#allocation2 + $0x60] sm:$0xff] %v1266
          %1283 = vst [vmem:[#allocation2 + $0x68] sm:$0xff] %v1267
          %1284 = vst [vmem:[#allocation2 + $0x70] sm:$0xff] %v1268
          %1285 = vst [vmem:[#allocation2 + $0x78] sm:$0xff] %v1269
        $region80: #{gnn_forward.1} parent=67 // pred_fallthru
          _
        %p1286 = scmp.eq.s32.totalorder %s24, 4
        // Predicated region
        $region81: #{gnn_forward.1} parent=67 // pred_check
          %p1287 = pneg %p1286
        $region82: #{gnn_forward.1} parent=67 // pred_check_branch
          %1289 = sbr.rel (%p1287) target = $region84
        $region83: #{gnn_forward.1} parent=67 // pred_region
          %v1290 = vld [vmem:[%s4] sm:$0xff]
          %1291 = vmatpush.msra.mxu0 %v1248
          %1292 = vmatpush.msra.mxu0 %v1246
          %1293 = vmatpush.msra.mxu0 %v1243
          %1294 = vmatpush.msra.mxu0 %v1241
          %1295 = vmatpush.msra.mxu0 %v1238
          %1296 = vmatpush.msra.mxu0 %v1236
          %1297 = vmatpush.msra.mxu0 %v1233
          %1298 = vmatpush.msra.mxu0 %v1231
          %1299 = vmatpush.msra.mxu0 %v1228
          %1300 = vmatpush.msra.mxu0 %v1226
          %1301 = vmatpush.msra.mxu0 %v1223
          %1302 = vmatpush.msra.mxu0 %v1221
          %1303 = vmatpush.msra.mxu0 %v1218
          %1304 = vmatpush.msra.mxu0 %v1216
          %1305 = vmatpush.msra.mxu0 %v1213
          %1306 = vmatpush.msra.mxu0 %v1211
          %1307 = vmatmul.f32.gmra.mxu0 %v1290
          %v1308 = vpop.f32.mrf.mxu0
          %v1309 = vadd.f32 0.0, %v1308
          %1310 = vdwg.mxu0
          %v1311 = vpack.c.bf16 %v1309, %v1309
          %v1312 = vld [vmem:[%s10] sm:$0xf]
          %v1313 = vld [vmem:[%s10 + $0x4] sm:$0xf]
          %v1314 = vld [vmem:[%s10 + $0x8] sm:$0xf]
          %v1315 = vld [vmem:[%s10 + $0xc] sm:$0xf]
          %v1316 = vld [vmem:[%s10 + $0x10] sm:$0xf]
          %v1317 = vld [vmem:[%s10 + $0x14] sm:$0xf]
          %v1318 = vld [vmem:[%s10 + $0x18] sm:$0xf]
          %v1319 = vld [vmem:[%s10 + $0x1c] sm:$0xf]
          %v1320 = vld [vmem:[%s10 + $0x20] sm:$0xf]
          %v1321 = vld [vmem:[%s10 + $0x24] sm:$0xf]
          %v1322 = vld [vmem:[%s10 + $0x28] sm:$0xf]
          %v1323 = vld [vmem:[%s10 + $0x2c] sm:$0xf]
          %v1324 = vld [vmem:[%s10 + $0x30] sm:$0xf]
          %v1325 = vld [vmem:[%s10 + $0x34] sm:$0xf]
          %v1326 = vld [vmem:[%s10 + $0x38] sm:$0xf]
          %v1327 = vld [vmem:[%s10 + $0x3c] sm:$0xf]
          %v1328 = vld [vmem:[%s11] sm:$0x1]
          %v1330 = vperm.slane %v1328, 0
          %v1348 = vunpack.c.l.b16 %v1312
          %v1349 = vunpack.c.l.b16 %v1313
          %v1350 = vunpack.c.l.b16 %v1314
          %v1351 = vunpack.c.l.b16 %v1315
          %v1352 = vunpack.c.l.b16 %v1316
          %v1353 = vunpack.c.l.b16 %v1317
          %v1354 = vunpack.c.l.b16 %v1318
          %v1355 = vunpack.c.l.b16 %v1319
          %v1356 = vunpack.c.l.b16 %v1320
          %v1357 = vunpack.c.l.b16 %v1321
          %v1358 = vunpack.c.l.b16 %v1322
          %v1359 = vunpack.c.l.b16 %v1323
          %v1360 = vunpack.c.l.b16 %v1324
          %v1361 = vunpack.c.l.b16 %v1325
          %v1362 = vunpack.c.l.b16 %v1326
          %v1363 = vunpack.c.l.b16 %v1327
          %v1364 = vpack.c.b16 %v1349, %v1348
          %v1365 = vpack.c.b16 %v1351, %v1350
          %v1366 = vpack.c.b16 %v1353, %v1352
          %v1367 = vpack.c.b16 %v1355, %v1354
          %v1368 = vpack.c.b16 %v1357, %v1356
          %v1369 = vpack.c.b16 %v1359, %v1358
          %v1370 = vpack.c.b16 %v1361, %v1360
          %v1371 = vpack.c.b16 %v1363, %v1362
          %1380 = vmatpush.bf16.msra.mxu0 %v1371
          %1381 = vmatpush.bf16.msra.mxu0 %v1370
          %1382 = vmatpush.bf16.msra.mxu0 %v1369
          %1383 = vmatpush.bf16.msra.mxu0 %v1368
          %1384 = vmatpush.bf16.msra.mxu0 %v1367
          %1385 = vmatpush.bf16.msra.mxu0 %v1366
          %1386 = vmatpush.bf16.msra.mxu0 %v1365
          %1387 = vmatpush.bf16.msra.mxu0 %v1364
          %1388 = vmatmul.bf16.gmra.mxu0 %v1311
          %v1389 = vpop.f32.mrf.mxu0
          %v1390 = vadd.f32 %v1330, %v1389
          %v1391 = vpop.f32.mrf.mxu0
          %1392 = vdwg.mxu0
          %1393 = vst [vmem:[%s12] sm:$0xff] %v1390
        $region84: #{gnn_forward.1} parent=67 // pred_fallthru
          _
        // Predicated region
        $region85: #{gnn_forward.1} parent=67 // pred_check
          %p1394 = pneg %p314
        $region86: #{gnn_forward.1} parent=67 // pred_check_branch
          %1396 = sbr.rel (%p1394) target = $region88
        $region87: #{gnn_forward.1} parent=67 // pred_region
          _
        $region88: #{gnn_forward.1} parent=67 // pred_fallthru
          _
        // Predicated region
        $region89: #{gnn_forward.1} parent=67 // pred_check
          %p1397 = pneg %p314
        $region90: #{gnn_forward.1} parent=67 // pred_check_branch
          %1399 = sbr.rel (%p1397) target = $region92
        $region91: #{gnn_forward.1} parent=67 // pred_region
          _
        $region92: #{gnn_forward.1} parent=67 // pred_fallthru
          _
      $region68: #{gnn_forward.1} parent=5 // pred_fallthru
        _
      %p1400 = scmp.le.s32.totalorder 2, %s19
      // Predicated region
      $region93: #{gnn_forward.1} parent=5 // pred_check
        %p1401 = pneg %p1400
      $region94: #{gnn_forward.1} parent=5 // pred_check_branch
        %1403 = sbr.rel (%p1401) target = $region96
      $region95: #{gnn_forward.1} parent=5 // pred_region
        %s1404 = ssub.s32 %s19, 2
      $region96: #{gnn_forward.1} parent=5 // pred_fallthru
        _
    $region6: #{gnn_forward.1} parent=1 // loop_footer
      %s23 = sadd.s32 1, %s19
    $region7: #{gnn_forward.1} parent=1 // loop_footer_branch
      %18 = sbr.rel target = $region3
    $region8: #{gnn_forward.1} parent=1 // loop_exit
      _
    %1405 = vsyncpa [#allocation4], 1
    %s1406 = scalar_lea.sflag [#allocation4], 1
    %1407 = vsyncpa %s1406, 1

</llo_original>
